<compile_context>
chip_gen: v7x
topology: tpu7x:2x2x1
jax: 0.10.0
libtpu: 0.0.40
codegen_flags: <defaults>
</compile_context>

<pallas_src>
import jax
import jax.numpy as jnp
from jax import lax
from jax.experimental import pallas as pl
from jax.experimental.pallas import tpu as pltpu


def _round_up(x, m):
    return -(-x // m) * m


def _round_down(x, m):
    return (x // m) * m


def _pick_vmem_limit_bytes():
    """Scoped-VMEM limit per device generation (conservative fallback for v7x)."""
    kind = ""
    try:
        kind = jax.devices()[0].device_kind.lower()
    except Exception:
        pass
    if "v5" in kind or "v6" in kind:      # 128 MiB physical VMEM per TensorCore
        return 100 << 20
    return 48 << 20                        # v7x (64 MiB physical) / unknown: leave headroom


def _choose_tiles(B, S, D_in, vmem_limit_bytes):
    """Pick (block_b, block_s) so the encoder working set fits the VMEM budget.

    Per grid step the encoder tile is double-buffered and the score/context
    chain creates ~2 same-size elementwise temporaries -> ~4x (bb * bs * D_in * 4)
    bytes.  Weights, scores scratch, outputs and Mosaic-internal scratch live in
    the remaining headroom (budget = 50% of the scoped limit).
    """
    budget = int(vmem_limit_bytes * 0.5)
    per_elem = 4 * D_in * 4                       # bytes per (b, s) element, ~4x factor

    block_b = min(_round_up(B, 8), 256)
    if B >= 16:
        # keep at least 2 batch tiles so "parallel" can shard across v7x's 2 TCs
        block_b = min(block_b, _round_up(-(-B // 2), 8))
    while block_b > 8 and block_b * 8 * per_elem > budget:
        block_b = _round_up(block_b // 2, 8)

    s_cap = max(8, _round_down(max(budget // (block_b * per_elem), 8), 8))
    block_s = min(_round_up(S, 8), s_cap)
    return block_b, block_s


def attention_kernel(tgt_ref, enc_ref, mask_ref, w_src_ref, w_h_t_ref, w_c_t_ref,
                     out_ref, attn_ref,
                     q_sc, m_sc, l_sc, ctx_sc, scores_sc):
    """Grid = (batch tiles, S tiles).  Online softmax over the S axis."""
    s_idx = pl.program_id(1)
    n_s = pl.num_programs(1)
    block_s = enc_ref.shape[1]

    @pl.when(s_idx == 0)
    def _init():
        # Target projection once per batch tile: (TB, D_out) @ (D_out, D_in) on the MXU.
        q_sc[...] = jnp.dot(tgt_ref[...], w_src_ref[...],
                            preferred_element_type=jnp.float32)
        m_sc[...] = jnp.full_like(m_sc, -jnp.inf)
        l_sc[...] = jnp.zeros_like(l_sc)
        ctx_sc[...] = jnp.zeros_like(ctx_sc)

    enc = enc_ref[...]                                     # (TB, TS, D_in) f32
    mask = mask_ref[...]                                   # (TB, TS, 1)    int32

    # Scores with S kept on the sublane axis: (TB, TS, 1).
    # Per-row mat-vec (M = 1 on the MXU) -> VPU multiply + XLU lane reduce.
    q = q_sc[...]                                          # (TB, D_in)
    scores = jnp.sum(q[:, None, :] * enc, axis=-1, keepdims=True)   # (TB, TS, 1)
    scores = jnp.where(mask != 0, -jnp.inf, scores)        # masked_fill_(-inf)

    # Online-softmax update (flash-attention style) over the S grid axis.
    m_prev = m_sc[...]                                     # (TB, 1)
    m_new = jnp.maximum(m_prev, jnp.max(scores, axis=1))   # (TB, 1)
    dead = m_new == -jnp.inf                               # row fully masked so far
    alpha = jnp.where(dead, 1.0, jnp.exp(m_prev - m_new))                      # (TB, 1)
    p = jnp.where(dead[..., None], 0.0, jnp.exp(scores - m_new[..., None]))    # (TB, TS, 1)

    l_sc[...] = alpha * l_sc[...] + jnp.sum(p, axis=1)                         # (TB, 1)
    ctx_sc[...] = alpha * ctx_sc[...] + jnp.sum(p * enc, axis=1)               # (TB, D_in)
    m_sc[...] = m_new

    # Stash the raw masked scores (sublane layout) for the final normalization.
    s_start = pl.multiple_of(s_idx * block_s, block_s)
    scores_sc[:, pl.ds(s_start, block_s), :] = scores

    @pl.when(s_idx == n_s - 1)
    def _finalize():
        inv_l = pl.reciprocal(l_sc[...], approx=False)     # (TB, 1)   EUP, exact
        m_fin = m_sc[...]                                  # (TB, 1)

        # Attention weights: exp(score - m) / l, computed on the sublane layout;
        # a single relayout to the lane-major (TB, S) output at the end.
        attn = jnp.exp(scores_sc[...] - m_fin[..., None]) * inv_l[..., None]   # (TB, Sp, 1)
        attn_ref[...] = attn.reshape(attn_ref.shape).astype(attn_ref.dtype)

        # Context normalization + K-split output projection (no in-kernel concat):
        #   out = tanh(tgt @ W_h^T + ctx @ W_c^T)
        ctx = ctx_sc[...] * inv_l                                               # (TB, D_in)
        h = jnp.dot(tgt_ref[...], w_h_t_ref[...], preferred_element_type=jnp.float32)
        h = h + jnp.dot(ctx, w_c_t_ref[...], preferred_element_type=jnp.float32)
        out_ref[...] = jnp.tanh(h).astype(out_ref.dtype)


def prepare_attention_params(w_src, w_chp):
    """One-time weight plumbing (hoisted out of the per-call path)."""
    d_out = w_src.shape[0]
    w_h_t = jnp.transpose(w_chp[:, :d_out])    # (D_out, D_out): multiplies tgt
    w_c_t = jnp.transpose(w_chp[:, d_out:])    # (D_in,  D_out): multiplies ctx
    return w_src, w_h_t, w_c_t


def attention_layer(tgt_input, encoder_out, src_mask, params, *, vmem_limit_bytes=None):
    w_src, w_h_t, w_c_t = params
    B, D_out = tgt_input.shape
    _, S, D_in = encoder_out.shape

    if vmem_limit_bytes is None:
        vmem_limit_bytes = _pick_vmem_limit_bytes()
    block_b, block_s = _choose_tiles(B, S, D_in, vmem_limit_bytes)

    Bp = _round_up(B, block_b)
    Sp = _round_up(S, block_s)

    # TODO(synk): pass lengths via scalar prefetch (or an int8 mask) when src_mask
    # is a pure length mask, to trim the mask HBM stream further.
    mask_i32 = src_mask.astype(jnp.int32)
    if Bp != B:
        tgt_input = jnp.pad(tgt_input, ((0, Bp - B), (0, 0)))
        encoder_out = jnp.pad(encoder_out, ((0, Bp - B), (0, 0), (0, 0)))
        mask_i32 = jnp.pad(mask_i32, ((0, Bp - B), (0, 0)))               # pad rows: unmasked
    if Sp != S:
        encoder_out = jnp.pad(encoder_out, ((0, 0), (0, Sp - S), (0, 0)))
        mask_i32 = jnp.pad(mask_i32, ((0, 0), (0, Sp - S)), constant_values=1)  # pad cols: masked
    mask_i32 = mask_i32.reshape(Bp, Sp, 1)     # keep S on the sublane axis in-kernel

    grid = (Bp // block_b, Sp // block_s)

    # TODO(synk): on v7x, single-buffer the three resident weight blocks
    # (pipeline_mode=pl.Buffered(1)) to reclaim the duplicated weight VMEM.
    out, attn_w = pl.pallas_call(
        attention_kernel,
        out_shape=(jax.ShapeDtypeStruct((Bp, D_out), tgt_input.dtype),
                   jax.ShapeDtypeStruct((Bp, Sp), jnp.float32)),
        grid=grid,
        in_specs=[
            pl.BlockSpec((block_b, D_out), lambda b, s: (b, 0)),              # tgt
            pl.BlockSpec((block_b, block_s, D_in), lambda b, s: (b, s, 0)),   # encoder
            pl.BlockSpec((block_b, block_s, 1), lambda b, s: (b, s, 0)),      # mask (S on sublanes)
            pl.BlockSpec((D_out, D_in), lambda b, s: (0, 0)),                 # W_src (resident)
            pl.BlockSpec((D_out, D_out), lambda b, s: (0, 0)),                # W_h^T (resident)
            pl.BlockSpec((D_in, D_out), lambda b, s: (0, 0)),                 # W_c^T (resident)
        ],
        out_specs=(
            pl.BlockSpec((block_b, D_out), lambda b, s: (b, 0)),
            pl.BlockSpec((block_b, Sp), lambda b, s: (b, 0)),
        ),
        scratch_shapes=[
            pltpu.VMEM((block_b, D_in), jnp.float32),      # q = tgt @ W_src
            pltpu.VMEM((block_b, 1), jnp.float32),         # running max m
            pltpu.VMEM((block_b, 1), jnp.float32),         # running denom l
            pltpu.VMEM((block_b, D_in), jnp.float32),      # ctx accumulator
            pltpu.VMEM((block_b, Sp, 1), jnp.float32),     # raw masked scores (sublane layout)
        ],
        compiler_params=pltpu.CompilerParams(
            dimension_semantics=("parallel", "arbitrary"),
            vmem_limit_bytes=int(vmem_limit_bytes)),
    )(tgt_input, encoder_out, mask_i32, w_src, w_h_t, w_c_t)

    return out[:B], attn_w[:B, :S]


def reference(tgt_input, encoder_out, src_mask, w_src, w_chp):
    # Pure-JAX reference mirroring the PyTorch forward (high-precision dots).
    hp = lax.Precision.HIGHEST
    proj = jnp.einsum('bsi,oi->bso', encoder_out, w_src, precision=hp)      # (B,S,D_out)
    scores = jnp.einsum('bo,bso->bs', tgt_input, proj, precision=hp)        # (B,S)
    scores = jnp.where(src_mask, -jnp.inf, scores)
    attn_w = jax.nn.softmax(scores, axis=-1)
    ctx = jnp.einsum('bs,bsi->bi', attn_w, encoder_out, precision=hp)       # (B,D_in)
    cat = jnp.concatenate([tgt_input, ctx], axis=1)                         # (B,D_out+D_in)
    out = jnp.tanh(jnp.dot(cat, w_chp.T, precision=hp))
    return out, attn_w


if __name__ == "__main__":
    B, S, D_in, D_out = 2, 8, 32, 32

    key = jax.random.PRNGKey(0)
    k1, k2, k3, k4 = jax.random.split(key, 4)

    # Deterministic parameter init (uniform, Kaiming-style bound), no checkpoints.
    bound_src = 1.0 / jnp.sqrt(D_in)
    bound_chp = 1.0 / jnp.sqrt(D_in + D_out)
    w_src = jax.random.uniform(k1, (D_out, D_in), jnp.float32, -bound_src, bound_src)
    w_chp = jax.random.uniform(k2, (D_out, D_out + D_in), jnp.float32, -bound_chp, bound_chp)

    tgt_input = jax.random.normal(k3, (B, D_out), jnp.float32)
    encoder_out = jax.random.normal(k4, (B, S, D_in), jnp.float32)

    # Mask out the tail of each source sequence (True = masked), as PyTorch would.
    lengths = jnp.array([S, S - 3], dtype=jnp.int32)
    src_mask = jnp.arange(S)[None, :] >= lengths[:, None]     # (B, S) bool

    params = prepare_attention_params(w_src, w_chp)           # one-time weight plumbing
    out, attn_w = attention_layer(tgt_input, encoder_out, src_mask, params)
    out = jax.block_until_ready(out)
    attn_w = jax.block_until_ready(attn_w)

    ref_out, ref_w = reference(tgt_input, encoder_out, src_mask, w_src, w_chp)
    # Relaxed tolerance: the reordered score contraction and the online softmax
    # change f32 summation order relative to the PyTorch-style reference.
    assert jnp.allclose(out, ref_out, atol=1e-4, rtol=1e-4)
    assert jnp.allclose(attn_w, ref_w, atol=1e-4, rtol=1e-4)

    print("KERNEL_OK")
</pallas_src>

<mosaic_0001>
module attributes {stable_mosaic.version = 11 : i64} {
  func.func @attention_kernel(%arg0: i32, %arg1: i32, %arg2: memref<8x32xf32, #tpu.memory_space<vmem>>, %arg3: memref<8x8x32xf32, #tpu.memory_space<vmem>>, %arg4: memref<8x8x1xi32, #tpu.memory_space<vmem>>, %arg5: memref<32x32xf32, #tpu.memory_space<vmem>>, %arg6: memref<32x32xf32, #tpu.memory_space<vmem>>, %arg7: memref<32x32xf32, #tpu.memory_space<vmem>>, %arg8: memref<8x32xf32, #tpu.memory_space<vmem>>, %arg9: memref<8x8xf32, #tpu.memory_space<vmem>>, %arg10: memref<8x32xf32, #tpu.memory_space<vmem>>, %arg11: memref<8x1xf32, #tpu.memory_space<vmem>>, %arg12: memref<8x1xf32, #tpu.memory_space<vmem>>, %arg13: memref<8x32xf32, #tpu.memory_space<vmem>>, %arg14: memref<8x8x1xf32, #tpu.memory_space<vmem>>) attributes {dimension_semantics = [#tpu.dimension_semantics<parallel>, #tpu.dimension_semantics<arbitrary>], iteration_bounds = array<i64: 1, 1>, scalar_prefetch = 0 : i64, scratch_operands = 5 : i64, tpu.core_type = #tpu.core_type<tc>, window_params = [{transform_indices = @transform_0, window_bounds = array<i64: 8, 32>}, {transform_indices = @transform_1, window_bounds = array<i64: 8, 8, 32>}, {transform_indices = @transform_2, window_bounds = array<i64: 8, 8, 1>}, {pipeline_mode = #tpu.pipeline_mode<synchronous>, transform_indices = @transform_3, window_bounds = array<i64: 32, 32>}, {pipeline_mode = #tpu.pipeline_mode<synchronous>, transform_indices = @transform_4, window_bounds = array<i64: 32, 32>}, {pipeline_mode = #tpu.pipeline_mode<synchronous>, transform_indices = @transform_5, window_bounds = array<i64: 32, 32>}, {transform_indices = @transform_6, window_bounds = array<i64: 8, 32>}, {transform_indices = @transform_7, window_bounds = array<i64: 8, 8>}]} {
    %c0_i32 = arith.constant 0 : i32
    %0 = arith.cmpi eq, %arg1, %c0_i32 : i32
    %1 = arith.extui %0 : i1 to i32
    %c0_i32_0 = arith.constant 0 : i32
    %2 = arith.cmpi ne, %1, %c0_i32_0 : i32
    scf.if %2 {
      %c0_32 = arith.constant 0 : index
      %c0_33 = arith.constant 0 : index
      %54 = vector.load %arg2[%c0_32, %c0_33] : memref<8x32xf32, #tpu.memory_space<vmem>>, vector<8x32xf32>
      %c0_34 = arith.constant 0 : index
      %c0_35 = arith.constant 0 : index
      %55 = vector.load %arg5[%c0_34, %c0_35] : memref<32x32xf32, #tpu.memory_space<vmem>>, vector<32x32xf32>
      %cst_36 = arith.constant dense<0.000000e+00> : vector<8x32xf32>
      %56 = tpu.matmul %54, %55, %cst_36 {dimension_numbers = #tpu.dot_dimension_numbers<[1], [0], [0], [1], [0, 0, 1, 1], [], []>} : vector<8x32xf32>, vector<32x32xf32>, vector<8x32xf32> -> vector<8x32xf32>
      %c0_37 = arith.constant 0 : index
      %c0_38 = arith.constant 0 : index
      %57 = vector.load %arg10[%c0_37, %c0_38] : memref<8x32xf32, #tpu.memory_space<vmem>>, vector<8x32xf32>
      tpu.vector_store %arg10[%c0_37, %c0_38], %56 {strides = array<i32>} : memref<8x32xf32, #tpu.memory_space<vmem>>, vector<8x32xf32>,
      %cst_39 = arith.constant 0xFF800000 : f32
      %58 = vector.broadcast %cst_39 : f32 to vector<8x1xf32>
      %c0_40 = arith.constant 0 : index
      %c0_41 = arith.constant 0 : index
      %59 = vector.load %arg11[%c0_40, %c0_41] : memref<8x1xf32, #tpu.memory_space<vmem>>, vector<8x1xf32>
      tpu.vector_store %arg11[%c0_40, %c0_41], %58 {strides = array<i32>} : memref<8x1xf32, #tpu.memory_space<vmem>>, vector<8x1xf32>,
      %cst_42 = arith.constant 0.000000e+00 : f32
      %60 = vector.broadcast %cst_42 : f32 to vector<8x1xf32>
      %c0_43 = arith.constant 0 : index
      %c0_44 = arith.constant 0 : index
      %61 = vector.load %arg12[%c0_43, %c0_44] : memref<8x1xf32, #tpu.memory_space<vmem>>, vector<8x1xf32>
      tpu.vector_store %arg12[%c0_43, %c0_44], %60 {strides = array<i32>} : memref<8x1xf32, #tpu.memory_space<vmem>>, vector<8x1xf32>,
      %cst_45 = arith.constant 0.000000e+00 : f32
      %62 = vector.broadcast %cst_45 : f32 to vector<8x32xf32>
      %c0_46 = arith.constant 0 : index
      %c0_47 = arith.constant 0 : index
      %63 = vector.load %arg13[%c0_46, %c0_47] : memref<8x32xf32, #tpu.memory_space<vmem>>, vector<8x32xf32>
      tpu.vector_store %arg13[%c0_46, %c0_47], %62 {strides = array<i32>} : memref<8x32xf32, #tpu.memory_space<vmem>>, vector<8x32xf32>,
    } else {
    }
    %c0 = arith.constant 0 : index
    %c0_1 = arith.constant 0 : index
    %c0_2 = arith.constant 0 : index
    %3 = vector.load %arg3[%c0, %c0_1, %c0_2] : memref<8x8x32xf32, #tpu.memory_space<vmem>>, vector<8x8x32xf32>
    %c0_3 = arith.constant 0 : index
    %c0_4 = arith.constant 0 : index
    %c0_5 = arith.constant 0 : index
    %4 = vector.load %arg4[%c0_3, %c0_4, %c0_5] : memref<8x8x1xi32, #tpu.memory_space<vmem>>, vector<8x8x1xi32>
    %c0_6 = arith.constant 0 : index
    %c0_7 = arith.constant 0 : index
    %5 = vector.load %arg10[%c0_6, %c0_7] : memref<8x32xf32, #tpu.memory_space<vmem>>, vector<8x32xf32>
    %6 = vector.shape_cast %5 : vector<8x32xf32> to vector<8x1x32xf32>
    %7 = vector.broadcast %6 : vector<8x1x32xf32> to vector<8x8x32xf32>
    %8 = arith.mulf %7, %3 : vector<8x8x32xf32>
    %cst = arith.constant dense<0.000000e+00> : vector<8x8xf32>
    %9 = vector.multi_reduction <add>, %8, %cst [2] : vector<8x8x32xf32> to vector<8x8xf32>
    %10 = vector.shape_cast %9 : vector<8x8xf32> to vector<8x8x1xf32>
    %c0_i32_8 = arith.constant 0 : i32
    %11 = vector.broadcast %c0_i32_8 : i32 to vector<8x8x1xi32>
    %12 = arith.cmpi ne, %4, %11 : vector<8x8x1xi32>
    %cst_9 = arith.constant 0xFF800000 : f32
    %13 = vector.broadcast %cst_9 : f32 to vector<8x8x1xf32>
    %14 = arith.select %12, %13, %10 : vector<8x8x1xi1>, vector<8x8x1xf32>
    %c0_10 = arith.constant 0 : index
    %c0_11 = arith.constant 0 : index
    %15 = vector.load %arg11[%c0_10, %c0_11] : memref<8x1xf32, #tpu.memory_space<vmem>>, vector<8x1xf32>
    %cst_12 = arith.constant dense<0xFF800000> : vector<8x1xf32>
    %16 = vector.multi_reduction <maximumf>, %14, %cst_12 [1] : vector<8x8x1xf32> to vector<8x1xf32>
    %17 = arith.maximumf %15, %16 : vector<8x1xf32>
    %cst_13 = arith.constant 0xFF800000 : f32
    %18 = vector.broadcast %cst_13 : f32 to vector<8x1xf32>
    %19 = arith.cmpf oeq, %17, %18 : vector<8x1xf32>
    %20 = arith.subf %15, %17 : vector<8x1xf32>
    %21 = math.exp %20 : vector<8x1xf32>
    %cst_14 = arith.constant 1.000000e+00 : f32
    %22 = vector.broadcast %cst_14 : f32 to vector<8x1xf32>
    %23 = arith.select %19, %22, %21 : vector<8x1xi1>, vector<8x1xf32>
    %24 = vector.shape_cast %19 : vector<8x1xi1> to vector<8x1x1xi1>
    %25 = vector.shape_cast %17 : vector<8x1xf32> to vector<8x1x1xf32>
    %26 = vector.broadcast %25 : vector<8x1x1xf32> to vector<8x8x1xf32>
    %27 = arith.subf %14, %26 : vector<8x8x1xf32>
    %28 = math.exp %27 : vector<8x8x1xf32>
    %cst_15 = arith.constant 0.000000e+00 : f32
    %29 = vector.shape_cast %24 : vector<8x1x1xi1> to vector<8x1x1xi1>
    %30 = vector.broadcast %29 : vector<8x1x1xi1> to vector<8x8x1xi1>
    %31 = vector.broadcast %cst_15 : f32 to vector<8x8x1xf32>
    %32 = arith.select %30, %31, %28 : vector<8x8x1xi1>, vector<8x8x1xf32>
    %c0_16 = arith.constant 0 : index
    %c0_17 = arith.constant 0 : index
    %33 = vector.load %arg12[%c0_16, %c0_17] : memref<8x1xf32, #tpu.memory_space<vmem>>, vector<8x1xf32>
    %34 = arith.mulf %23, %33 : vector<8x1xf32>
    %cst_18 = arith.constant dense<0.000000e+00> : vector<8x1xf32>
    %35 = vector.multi_reduction <add>, %32, %cst_18 [1] : vector<8x8x1xf32> to vector<8x1xf32>
    %36 = arith.addf %34, %35 : vector<8x1xf32>
    %c0_19 = arith.constant 0 : index
    %c0_20 = arith.constant 0 : index
    %37 = vector.load %arg12[%c0_19, %c0_20] : memref<8x1xf32, #tpu.memory_space<vmem>>, vector<8x1xf32>
    tpu.vector_store %arg12[%c0_19, %c0_20], %36 {strides = array<i32>} : memref<8x1xf32, #tpu.memory_space<vmem>>, vector<8x1xf32>,
    %c0_21 = arith.constant 0 : index
    %c0_22 = arith.constant 0 : index
    %38 = vector.load %arg13[%c0_21, %c0_22] : memref<8x32xf32, #tpu.memory_space<vmem>>, vector<8x32xf32>
    %39 = vector.broadcast %23 : vector<8x1xf32> to vector<8x32xf32>
    %40 = arith.mulf %39, %38 : vector<8x32xf32>
    %41 = vector.broadcast %32 : vector<8x8x1xf32> to vector<8x8x32xf32>
    %42 = arith.mulf %41, %3 : vector<8x8x32xf32>
    %cst_23 = arith.constant dense<0.000000e+00> : vector<8x32xf32>
    %43 = vector.multi_reduction <add>, %42, %cst_23 [1] : vector<8x8x32xf32> to vector<8x32xf32>
    %44 = arith.addf %40, %43 : vector<8x32xf32>
    %c0_24 = arith.constant 0 : index
    %c0_25 = arith.constant 0 : index
    %45 = vector.load %arg13[%c0_24, %c0_25] : memref<8x32xf32, #tpu.memory_space<vmem>>, vector<8x32xf32>
    tpu.vector_store %arg13[%c0_24, %c0_25], %44 {strides = array<i32>} : memref<8x32xf32, #tpu.memory_space<vmem>>, vector<8x32xf32>,
    %c0_26 = arith.constant 0 : index
    %c0_27 = arith.constant 0 : index
    %46 = vector.load %arg11[%c0_26, %c0_27] : memref<8x1xf32, #tpu.memory_space<vmem>>, vector<8x1xf32>
    tpu.vector_store %arg11[%c0_26, %c0_27], %17 {strides = array<i32>} : memref<8x1xf32, #tpu.memory_space<vmem>>, vector<8x1xf32>,
    %c8_i32 = arith.constant 8 : i32
    %47 = arith.muli %arg1, %c8_i32 : i32
    %48 = tpu.assume_multiple %47, 8 : i32
    %c0_28 = arith.constant 0 : index
    %49 = arith.index_cast %48 : i32 to index
    %c0_29 = arith.constant 0 : index
    %50 = vector.load %arg14[%c0_28, %49, %c0_29] : memref<8x8x1xf32, #tpu.memory_space<vmem>>, vector<8x8x1xf32>
    tpu.vector_store %arg14[%c0_28, %49, %c0_29], %14 {strides = array<i32>} : memref<8x8x1xf32, #tpu.memory_space<vmem>>, vector<8x8x1xf32>,
    %c0_i32_30 = arith.constant 0 : i32
    %51 = arith.cmpi eq, %arg1, %c0_i32_30 : i32
    %52 = arith.extui %51 : i1 to i32
    %c0_i32_31 = arith.constant 0 : i32
    %53 = arith.cmpi ne, %52, %c0_i32_31 : i32
    scf.if %53 {
      %c0_32 = arith.constant 0 : index
      %c0_33 = arith.constant 0 : index
      %54 = vector.load %arg12[%c0_32, %c0_33] : memref<8x1xf32, #tpu.memory_space<vmem>>, vector<8x1xf32>
      %55 = tpu.reciprocal %54 : vector<8x1xf32> -> vector<8x1xf32>
      %c0_34 = arith.constant 0 : index
      %c0_35 = arith.constant 0 : index
      %56 = vector.load %arg11[%c0_34, %c0_35] : memref<8x1xf32, #tpu.memory_space<vmem>>, vector<8x1xf32>
      %c0_36 = arith.constant 0 : index
      %c0_37 = arith.constant 0 : index
      %c0_38 = arith.constant 0 : index
      %57 = vector.load %arg14[%c0_36, %c0_37, %c0_38] : memref<8x8x1xf32, #tpu.memory_space<vmem>>, vector<8x8x1xf32>
      %58 = vector.shape_cast %56 : vector<8x1xf32> to vector<8x1x1xf32>
      %59 = vector.broadcast %58 : vector<8x1x1xf32> to vector<8x8x1xf32>
      %60 = arith.subf %57, %59 : vector<8x8x1xf32>
      %61 = math.exp %60 : vector<8x8x1xf32>
      %62 = vector.shape_cast %55 : vector<8x1xf32> to vector<8x1x1xf32>
      %63 = vector.broadcast %62 : vector<8x1x1xf32> to vector<8x8x1xf32>
      %64 = arith.mulf %61, %63 : vector<8x8x1xf32>
      %65 = vector.shape_cast %64 : vector<8x8x1xf32> to vector<8x8xf32>
      %c0_39 = arith.constant 0 : index
      %c0_40 = arith.constant 0 : index
      %66 = vector.load %arg9[%c0_39, %c0_40] : memref<8x8xf32, #tpu.memory_space<vmem>>, vector<8x8xf32>
      tpu.vector_store %arg9[%c0_39, %c0_40], %65 {strides = array<i32>} : memref<8x8xf32, #tpu.memory_space<vmem>>, vector<8x8xf32>,
      %c0_41 = arith.constant 0 : index
      %c0_42 = arith.constant 0 : index
      %67 = vector.load %arg13[%c0_41, %c0_42] : memref<8x32xf32, #tpu.memory_space<vmem>>, vector<8x32xf32>
      %68 = vector.broadcast %55 : vector<8x1xf32> to vector<8x32xf32>
      %69 = arith.mulf %67, %68 : vector<8x32xf32>
      %c0_43 = arith.constant 0 : index
      %c0_44 = arith.constant 0 : index
      %70 = vector.load %arg2[%c0_43, %c0_44] : memref<8x32xf32, #tpu.memory_space<vmem>>, vector<8x32xf32>
      %c0_45 = arith.constant 0 : index
      %c0_46 = arith.constant 0 : index
      %71 = vector.load %arg6[%c0_45, %c0_46] : memref<32x32xf32, #tpu.memory_space<vmem>>, vector<32x32xf32>
      %cst_47 = arith.constant dense<0.000000e+00> : vector<8x32xf32>
      %72 = tpu.matmul %70, %71, %cst_47 {dimension_numbers = #tpu.dot_dimension_numbers<[1], [0], [0], [1], [0, 0, 1, 1], [], []>} : vector<8x32xf32>, vector<32x32xf32>, vector<8x32xf32> -> vector<8x32xf32>
      %c0_48 = arith.constant 0 : index
      %c0_49 = arith.constant 0 : index
      %73 = vector.load %arg7[%c0_48, %c0_49] : memref<32x32xf32, #tpu.memory_space<vmem>>, vector<32x32xf32>
      %cst_50 = arith.constant dense<0.000000e+00> : vector<8x32xf32>
      %74 = tpu.matmul %69, %73, %cst_50 {dimension_numbers = #tpu.dot_dimension_numbers<[1], [0], [0], [1], [0, 0, 1, 1], [], []>} : vector<8x32xf32>, vector<32x32xf32>, vector<8x32xf32> -> vector<8x32xf32>
      %75 = arith.addf %72, %74 : vector<8x32xf32>
      %76 = math.tanh %75 : vector<8x32xf32>
      %c0_51 = arith.constant 0 : index
      %c0_52 = arith.constant 0 : index
      %77 = vector.load %arg8[%c0_51, %c0_52] : memref<8x32xf32, #tpu.memory_space<vmem>>, vector<8x32xf32>
      tpu.vector_store %arg8[%c0_51, %c0_52], %76 {strides = array<i32>} : memref<8x32xf32, #tpu.memory_space<vmem>>, vector<8x32xf32>,
    } else {
    }
    return
  }
  func.func @transform_0(%arg0: i32, %arg1: i32) -> (i32, i32) {
    %c0_i32 = arith.constant 0 : i32
    %c0_i32_0 = arith.constant 0 : i32
    return %arg0, %c0_i32 : i32, i32
  }
  func.func @transform_1(%arg0: i32, %arg1: i32) -> (i32, i32, i32) {
    %c0_i32 = arith.constant 0 : i32
    %c0_i32_0 = arith.constant 0 : i32
    return %arg0, %arg1, %c0_i32 : i32, i32, i32
  }
  func.func @transform_2(%arg0: i32, %arg1: i32) -> (i32, i32, i32) {
    %c0_i32 = arith.constant 0 : i32
    %c0_i32_0 = arith.constant 0 : i32
    return %arg0, %arg1, %c0_i32 : i32, i32, i32
  }
  func.func @transform_3(%arg0: i32, %arg1: i32) -> (i32, i32) {
    %c0_i32 = arith.constant 0 : i32
    %c0_i32_0 = arith.constant 0 : i32
    %c0_i32_1 = arith.constant 0 : i32
    return %c0_i32, %c0_i32_0 : i32, i32
  }
  func.func @transform_4(%arg0: i32, %arg1: i32) -> (i32, i32) {
    %c0_i32 = arith.constant 0 : i32
    %c0_i32_0 = arith.constant 0 : i32
    %c0_i32_1 = arith.constant 0 : i32
    return %c0_i32, %c0_i32_0 : i32, i32
  }
  func.func @transform_5(%arg0: i32, %arg1: i32) -> (i32, i32) {
    %c0_i32 = arith.constant 0 : i32
    %c0_i32_0 = arith.constant 0 : i32
    %c0_i32_1 = arith.constant 0 : i32
    return %c0_i32, %c0_i32_0 : i32, i32
  }
  func.func @transform_6(%arg0: i32, %arg1: i32) -> (i32, i32) {
    %c0_i32 = arith.constant 0 : i32
    %c0_i32_0 = arith.constant 0 : i32
    return %arg0, %c0_i32 : i32, i32
  }
  func.func @transform_7(%arg0: i32, %arg1: i32) -> (i32, i32) {
    %c0_i32 = arith.constant 0 : i32
    %c0_i32_0 = arith.constant 0 : i32
    return %arg0, %c0_i32 : i32, i32
  }
}

</mosaic_0001>

<llo_original>
// kernel: tpu_custom_call.1
$region0: #{tpu_custom_call.1}
  #allocation0 [shape = 'u32[]', space=smem, size = 0x4, offset = 0x4, fixed_abs, tag = 'smem constant byte address 0x4 - core index']
  #allocation1 [shape = 'u32[144,128]{1,0:T(1,128)}', space=vmem, size = 0x12000, scoped, tag = 'internal scratch']
  #allocation2 [shape = 'f32[8,32]{1,0:T(8,128)}', space=vmem, size = 0x1000, scoped, tag = 'scratch operand']
  #allocation3 [shape = 'f32[8,1]{1,0:T(8,128)}', space=vmem, size = 0x1000, scoped, tag = 'scratch operand']
  #allocation4 [shape = 'f32[8,1]{1,0:T(8,128)}', space=vmem, size = 0x1000, scoped, tag = 'scratch operand']
  #allocation5 [shape = 'f32[8,32]{1,0:T(8,128)}', space=vmem, size = 0x1000, scoped, tag = 'scratch operand']
  #allocation6 [shape = 'f32[8,8,1]{2,1,0:T(8,128)}', space=vmem, size = 0x8000, scoped, tag = 'scratch operand']
  %s0 = inlined_call_operand.vmem [shape: f32[8,32], index: 0, kind: input, shape index: {}]
  %s1 = inlined_call_operand.vmem [shape: f32[8,8,32], index: 1, kind: input, shape index: {}]
  %s2 = inlined_call_operand.vmem [shape: s32[8,8,1], index: 2, kind: input, shape index: {}]
  %s3 = inlined_call_operand.hbm [shape: f32[32,32], index: 3, kind: input, shape index: {}]
  %s4 = inlined_call_operand.hbm [shape: f32[32,32], index: 4, kind: input, shape index: {}]
  %s5 = inlined_call_operand.hbm [shape: f32[32,32], index: 5, kind: input, shape index: {}]
  %s6 = inlined_call_operand.hbm [shape: f32[8,32], index: 6, kind: output, shape index: {0}]
  %s7 = inlined_call_operand.hbm [shape: f32[8,8], index: 7, kind: output, shape index: {1}]
  %8 = xla_tuple %s6, %s7
  %s9 = sld [smem:[#allocation0]]
  $region62: #{tpu_custom_call.1} parent=0
    _
  %s11 = ssub.s32 1, %s9
  %s12 = scalar_select 0, %s11, %s9
  $region1: #{tpu_custom_call.1} parent=0
    #allocation7 [shape = 'u8[16384]{0}', space=vmem, size = 0x4000, scoped, tag = 'input window, operand 3, single buffered']
    #allocation8 [shape = 's32[1]{0}', space=sflag, size = 0x4, scoped, tag = 'scoped memory for tpu_custom_call.1']
    #allocation9 [shape = 's32[1]{0}', space=sflag, size = 0x4, scoped, tag = 'scoped memory for tpu_custom_call.1']
    #allocation10 [shape = 'u8[16384]{0}', space=vmem, size = 0x4000, scoped, tag = 'input window, operand 4, single buffered']
    #allocation11 [shape = 's32[1]{0}', space=sflag, size = 0x4, scoped, tag = 'scoped memory for tpu_custom_call.1']
    #allocation12 [shape = 'u8[16384]{0}', space=vmem, size = 0x4000, scoped, tag = 'input window, operand 5, single buffered']
    #allocation13 [shape = 'u8[4096]{0}', space=vmem, size = 0x1000, scoped, tag = 'output window, operand 0, single buffered']
    #allocation14 [shape = 'u8[4096]{0}', space=vmem, size = 0x1000, scoped, tag = 'output window, operand 1, single buffered']
    #allocation15 [shape = 's32[1]{0}', space=sflag, size = 0x4, scoped, tag = 'scoped memory for tpu_custom_call.1']
    %13 = vsyncpa [#allocation8], 0
    %14 = vsyncpa [#allocation11], 0
    %15 = vsyncpa [#allocation9], 0
    %16 = vsyncpa [#allocation15], 0
    // Predicated region
    $region2: #{tpu_custom_call.1} parent=1 // pred_check
      _
    $region3: #{tpu_custom_call.1} parent=1 // pred_check_branch
      %18 = sbr.rel (0) target = $region5
    $region4: #{tpu_custom_call.1} parent=1 // pred_region
      _
    $region5: #{tpu_custom_call.1} parent=1 // pred_fallthru
      _
    // Predicated region
    $region6: #{tpu_custom_call.1} parent=1 // pred_check
      _
    $region7: #{tpu_custom_call.1} parent=1 // pred_check_branch
      %20 = sbr.rel (0) target = $region9
    $region8: #{tpu_custom_call.1} parent=1 // pred_region
      _
    $region9: #{tpu_custom_call.1} parent=1 // pred_fallthru
      _
    // Predicated region
    $region10: #{tpu_custom_call.1} parent=1 // pred_check
      _
    $region11: #{tpu_custom_call.1} parent=1 // pred_check_branch
      %22 = sbr.rel (0) target = $region13
    $region12: #{tpu_custom_call.1} parent=1 // pred_region
      _
    $region13: #{tpu_custom_call.1} parent=1 // pred_fallthru
      _
    // Predicated region
    $region14: #{tpu_custom_call.1} parent=1 // pred_check
      _
    $region15: #{tpu_custom_call.1} parent=1 // pred_check_branch
      %24 = sbr.rel (0) target = $region17
    $region16: #{tpu_custom_call.1} parent=1 // pred_region
      %s26 = ssub.s32 512, 512
      %27 = vsyncadd [#allocation8], %s26
      %s28 = sshll.u32 [#allocation7], 4
      %s29 = int_to_ptr.vmem [resolvable:$true] %s28
      %34 = dma.hbm_to_vmem [thread:$0]  %s3, 512, %s29, [#allocation8], 128, 128, 8
    $region17: #{tpu_custom_call.1} parent=1 // pred_fallthru
      _
    // Predicated region
    $region18: #{tpu_custom_call.1} parent=1 // pred_check
      _
    $region19: #{tpu_custom_call.1} parent=1 // pred_check_branch
      %36 = sbr.rel (0) target = $region21
    $region20: #{tpu_custom_call.1} parent=1 // pred_region
      %s38 = ssub.s32 512, 512
      %39 = vsyncadd [#allocation11], %s38
      %s40 = sshll.u32 [#allocation10], 4
      %s41 = int_to_ptr.vmem [resolvable:$true] %s40
      %46 = dma.hbm_to_vmem [thread:$0]  %s4, 512, %s41, [#allocation11], 128, 128, 8
    $region21: #{tpu_custom_call.1} parent=1 // pred_fallthru
      _
    // Predicated region
    $region22: #{tpu_custom_call.1} parent=1 // pred_check
      _
    $region23: #{tpu_custom_call.1} parent=1 // pred_check_branch
      %48 = sbr.rel (0) target = $region25
    $region24: #{tpu_custom_call.1} parent=1 // pred_region
      %s50 = ssub.s32 512, 512
      %51 = vsyncadd [#allocation11], %s50
      %s52 = sshll.u32 [#allocation12], 4
      %s53 = int_to_ptr.vmem [resolvable:$true] %s52
      %58 = dma.hbm_to_vmem [thread:$0]  %s5, 512, %s53, [#allocation11], 128, 128, 8
    $region25: #{tpu_custom_call.1} parent=1 // pred_fallthru
      _
    // Predicated region
    $region26: #{tpu_custom_call.1} parent=1 // pred_check
      _
    $region27: #{tpu_custom_call.1} parent=1 // pred_check_branch
      %60 = sbr.rel (0) target = $region29
    $region28: #{tpu_custom_call.1} parent=1 // pred_region
      %61 = dma.done [#allocation8], 512
    $region29: #{tpu_custom_call.1} parent=1 // pred_fallthru
      _
    // Predicated region
    $region30: #{tpu_custom_call.1} parent=1 // pred_check
      _
    $region31: #{tpu_custom_call.1} parent=1 // pred_check_branch
      %63 = sbr.rel (0) target = $region33
    $region32: #{tpu_custom_call.1} parent=1 // pred_region
      %64 = dma.done [#allocation11], 512
    $region33: #{tpu_custom_call.1} parent=1 // pred_fallthru
      _
    // Predicated region
    $region34: #{tpu_custom_call.1} parent=1 // pred_check
      _
    $region35: #{tpu_custom_call.1} parent=1 // pred_check_branch
      %66 = sbr.rel (0) target = $region37
    $region36: #{tpu_custom_call.1} parent=1 // pred_region
      %67 = dma.done [#allocation11], 512
    $region37: #{tpu_custom_call.1} parent=1 // pred_fallthru
      _
    %p68 = scmp.eq.s32.totalorder 0, 0
    // Predicated region
    $region38: #{tpu_custom_call.1} parent=1 // pred_check
      %p69 = pneg %p68
    $region39: #{tpu_custom_call.1} parent=1 // pred_check_branch
      %71 = sbr.rel (%p69) target = $region41
    $region40: #{tpu_custom_call.1} parent=1 // pred_region
      %v72 = vld [vmem:[%s0] sm:$0xff]
      %v73 = vld [vmem:[#allocation7] sm:$0xff]
      %v74 = vld [vmem:[#allocation7 + $0x8] sm:$0xff]
      %v75 = vld [vmem:[#allocation7 + $0x10] sm:$0xff]
      %v76 = vld [vmem:[#allocation7 + $0x18] sm:$0xff]
      %vm77 = vcmask 261120
      %v79 = vsel %vm77, %v72, 0
      %81 = vmatprep.subr.mxu0 0.0
      %82 = vmatpush1.msra.mxu0 %v73
      %83 = vmatprep.subr.mxu0 0.0
      %84 = vmatpush1.msra.mxu0 %v74
      %85 = vmatprep.subr.mxu0 0.0
      %86 = vmatpush1.msra.mxu0 %v75
      %87 = vmatprep.subr.mxu0 0.0
      %88 = vmatpush1.msra.mxu0 %v76
      %89 = vmatprep.subr.mxu0 0.0
      %90 = vmatpush1.msra.mxu0 0.0
      %91 = vmatprep.subr.mxu0 0.0
      %92 = vmatpush1.msra.mxu0 0.0
      %93 = vmatprep.subr.mxu0 0.0
      %94 = vmatpush1.msra.mxu0 0.0
      %95 = vmatprep.subr.mxu0 0.0
      %96 = vmatpush1.msra.mxu0 0.0
      %97 = vmatprep.subr.mxu0 0.0
      %98 = vmatpush1.msra.mxu0 0.0
      %99 = vmatprep.subr.mxu0 0.0
      %100 = vmatpush1.msra.mxu0 0.0
      %101 = vmatprep.subr.mxu0 0.0
      %102 = vmatpush1.msra.mxu0 0.0
      %103 = vmatprep.subr.mxu0 0.0
      %104 = vmatpush1.msra.mxu0 0.0
      %105 = vmatprep.subr.mxu0 0.0
      %106 = vmatpush1.msra.mxu0 0.0
      %107 = vmatprep.subr.mxu0 0.0
      %108 = vmatpush1.msra.mxu0 0.0
      %109 = vmatprep.subr.mxu0 0.0
      %110 = vmatpush1.msra.mxu0 0.0
      %111 = vmatprep.subr.mxu0 0.0
      %112 = vmatpush1.msra.mxu0 0.0
      %113 = vmatprep.subr.mxu0 0.0
      %114 = vmatpush1.msra.mxu0 0.0
      %115 = vmatprep.subr.mxu0 0.0
      %116 = vmatpush1.msra.mxu0 0.0
      %117 = vmatprep.subr.mxu0 0.0
      %118 = vmatpush1.msra.mxu0 0.0
      %119 = vmatprep.subr.mxu0 0.0
      %120 = vmatpush1.msra.mxu0 0.0
      %121 = vmatprep.subr.mxu0 0.0
      %122 = vmatpush1.msra.mxu0 0.0
      %123 = vmatprep.subr.mxu0 0.0
      %124 = vmatpush1.msra.mxu0 0.0
      %125 = vmatprep.subr.mxu0 0.0
      %126 = vmatpush1.msra.mxu0 0.0
      %127 = vmatprep.subr.mxu0 0.0
      %128 = vmatpush1.msra.mxu0 0.0
      %129 = vmatprep.subr.mxu0 0.0
      %130 = vmatpush1.msra.mxu0 0.0
      %131 = vmatprep.subr.mxu0 0.0
      %132 = vmatpush1.msra.mxu0 0.0
      %133 = vmatprep.subr.mxu0 0.0
      %134 = vmatpush1.msra.mxu0 0.0
      %135 = vmatprep.subr.mxu0 0.0
      %136 = vmatpush1.msra.mxu0 0.0
      %137 = vmatprep.subr.mxu0 0.0
      %138 = vmatpush1.msra.mxu0 0.0
      %139 = vmatprep.subr.mxu0 0.0
      %140 = vmatpush1.msra.mxu0 0.0
      %141 = vmatprep.subr.mxu0 0.0
      %142 = vmatpush1.msra.mxu0 0.0
      %143 = vmatprep.subr.mxu0 0.0
      %144 = vmatpush1.msra.mxu0 0.0
      %145 = vmatprep.mubr.f32.mxu0 0.0
      %146 = vmatmul.mubr.f32.gmra.mrb[0].mxu0 %v79
      %v147 = vpop.f32.mrb[0].mxu0
      %v148 = vadd.f32 0.0, %v147
      %v149 = vpop.f32.mrb[0].mxu0
      %150 = vdwg.mxu0
      %151 = vst.msk [vmem:[#allocation2] sm:$0xff] %vm77, %v148
      %vm152 = vcmask 7168
      %153 = vst.msk [vmem:[#allocation3] sm:$0xff] %vm152, -inf
      %154 = vst.msk [vmem:[#allocation4] sm:$0xff] %vm152, 0.0
      %155 = vst.msk [vmem:[#allocation5] sm:$0xff] %vm77, 0.0
    $region41: #{tpu_custom_call.1} parent=1 // pred_fallthru
      _
    %v156 = vld [vmem:[%s1] sm:$0xff]
    %v157 = vld [vmem:[%s1 + $0x8] sm:$0xff]
    %v158 = vld [vmem:[%s1 + $0x10] sm:$0xff]
    %v159 = vld [vmem:[%s1 + $0x18] sm:$0xff]
    %v160 = vld [vmem:[%s1 + $0x20] sm:$0xff]
    %v161 = vld [vmem:[%s1 + $0x28] sm:$0xff]
    %v162 = vld [vmem:[%s1 + $0x30] sm:$0xff]
    %v163 = vld [vmem:[%s1 + $0x38] sm:$0xff]
    %v164 = vld [vmem:[%s2] sm:$0xff]
    %v165 = vld [vmem:[%s2 + $0x8] sm:$0xff]
    %v166 = vld [vmem:[%s2 + $0x10] sm:$0xff]
    %v167 = vld [vmem:[%s2 + $0x18] sm:$0xff]
    %v168 = vld [vmem:[%s2 + $0x20] sm:$0xff]
    %v169 = vld [vmem:[%s2 + $0x28] sm:$0xff]
    %v170 = vld [vmem:[%s2 + $0x30] sm:$0xff]
    %v171 = vld [vmem:[%s2 + $0x38] sm:$0xff]
    %v172 = vld [vmem:[#allocation2] sm:$0xff]
    %v174 = vcombine.high %v172, %v172
    %v176 = vunpack.c.l.s4 1966171168
    %v177 = vunpack.c.0.s8 %v176
    %v178 = vlaneseq
    %v179 = vshrl.u32 %v178, 7
    %v180 = vsub.s32 %v177, %v179
    %v181 = vrot.slane %v172, %v180
    %v183 = vunpack.c.l.s4 1966171168
    %v184 = vunpack.c.0.s8 %v183
    %v185 = vlaneseq
    %v186 = vshrl.u32 %v185, 7
    %v187 = vsub.s32 %v184, %v186
    %v188 = vrot.slane %v174, %v187
    %v189 = vcombine.high %v181, %v181
    %v190 = vcombine.high %v188, %v188
    %v192 = vunpack.c.l.s4 1966171168
    %v193 = vunpack.c.0.s8 %v192
    %v194 = vlaneseq
    %v195 = vshrl.u32 %v194, 7
    %v196 = vsub.s32 %v193, %v195
    %v197 = vrot.slane %v181, %v196
    %v199 = vunpack.c.l.s4 1966171168
    %v200 = vunpack.c.0.s8 %v199
    %v201 = vlaneseq
    %v202 = vshrl.u32 %v201, 7
    %v203 = vsub.s32 %v200, %v202
    %v204 = vrot.slane %v188, %v203
    %v206 = vunpack.c.l.s4 1966171168
    %v207 = vunpack.c.0.s8 %v206
    %v208 = vlaneseq
    %v209 = vshrl.u32 %v208, 7
    %v210 = vsub.s32 %v207, %v209
    %v211 = vrot.slane %v189, %v210
    %v213 = vunpack.c.l.s4 1966171168
    %v214 = vunpack.c.0.s8 %v213
    %v215 = vlaneseq
    %v216 = vshrl.u32 %v215, 7
    %v217 = vsub.s32 %v214, %v216
    %v218 = vrot.slane %v190, %v217
    %v219 = vcombine.high %v197, %v197
    %v220 = vcombine.high %v204, %v204
    %v221 = vcombine.high %v211, %v211
    %v222 = vcombine.high %v218, %v218
    %v223 = vlaneseq
    %v224 = vshrl.u32 %v223, 7
    %v225 = vsub.s32 0, %v224
    %v226 = vrot.slane %v197, %v225
    %v227 = vlaneseq
    %v228 = vshrl.u32 %v227, 7
    %v229 = vsub.s32 0, %v228
    %v230 = vrot.slane %v211, %v229
    %v231 = vlaneseq
    %v232 = vshrl.u32 %v231, 7
    %v233 = vsub.s32 0, %v232
    %v234 = vrot.slane %v219, %v233
    %v235 = vlaneseq
    %v236 = vshrl.u32 %v235, 7
    %v237 = vsub.s32 0, %v236
    %v238 = vrot.slane %v221, %v237
    %v239 = vlaneseq
    %v240 = vshrl.u32 %v239, 7
    %v241 = vsub.s32 0, %v240
    %v242 = vrot.slane %v204, %v241
    %v243 = vlaneseq
    %v244 = vshrl.u32 %v243, 7
    %v245 = vsub.s32 0, %v244
    %v246 = vrot.slane %v218, %v245
    %v247 = vlaneseq
    %v248 = vshrl.u32 %v247, 7
    %v249 = vsub.s32 0, %v248
    %v250 = vrot.slane %v220, %v249
    %v251 = vlaneseq
    %v252 = vshrl.u32 %v251, 7
    %v253 = vsub.s32 0, %v252
    %v254 = vrot.slane %v222, %v253
    %v263 = vmul.f32 %v226, %v156
    %v264 = vmul.f32 %v230, %v157
    %v265 = vmul.f32 %v234, %v158
    %v266 = vmul.f32 %v238, %v159
    %v267 = vmul.f32 %v242, %v160
    %v268 = vmul.f32 %v246, %v161
    %v269 = vmul.f32 %v250, %v162
    %v270 = vmul.f32 %v254, %v163
    %vm271 = vcmask 261120
    %v272 = vsel %vm271, %v263, 0.0
    %273 = vadd.xlane.f32.xlu0 %v272
    %v274 = vpop.xlane.xlu0 %273
    %v275 = vsel %vm271, %v264, 0.0
    %276 = vadd.xlane.f32.xlu0 %v275
    %v277 = vpop.xlane.xlu0 %276
    %v278 = vsel %vm271, %v265, 0.0
    %279 = vadd.xlane.f32.xlu0 %v278
    %v280 = vpop.xlane.xlu0 %279
    %v281 = vsel %vm271, %v266, 0.0
    %282 = vadd.xlane.f32.xlu0 %v281
    %v283 = vpop.xlane.xlu0 %282
    %v284 = vsel %vm271, %v267, 0.0
    %285 = vadd.xlane.f32.xlu0 %v284
    %v286 = vpop.xlane.xlu0 %285
    %v287 = vsel %vm271, %v268, 0.0
    %288 = vadd.xlane.f32.xlu0 %v287
    %v289 = vpop.xlane.xlu0 %288
    %v290 = vsel %vm271, %v269, 0.0
    %291 = vadd.xlane.f32.xlu0 %v290
    %v292 = vpop.xlane.xlu0 %291
    %v293 = vsel %vm271, %v270, 0.0
    %294 = vadd.xlane.f32.xlu0 %v293
    %v295 = vpop.xlane.xlu0 %294
    %vm296 = vcmp.ne.s32.totalorder %v164, 0
    %vm297 = vcmp.ne.s32.totalorder %v165, 0
    %vm298 = vcmp.ne.s32.totalorder %v166, 0
    %vm299 = vcmp.ne.s32.totalorder %v167, 0
    %vm300 = vcmp.ne.s32.totalorder %v168, 0
    %vm301 = vcmp.ne.s32.totalorder %v169, 0
    %vm302 = vcmp.ne.s32.totalorder %v170, 0
    %vm303 = vcmp.ne.s32.totalorder %v171, 0
    %v304 = vsel %vm296, -inf, %v274
    %v305 = vsel %vm297, -inf, %v277
    %v306 = vsel %vm298, -inf, %v280
    %v307 = vsel %vm299, -inf, %v283
    %v308 = vsel %vm300, -inf, %v286
    %v309 = vsel %vm301, -inf, %v289
    %v310 = vsel %vm302, -inf, %v292
    %v311 = vsel %vm303, -inf, %v295
    %v312 = vld [vmem:[#allocation3] sm:$0xff]
    %vm313 = vcmask 7168
    %v314 = vsel %vm313, %v304, -inf
    %v315 = vrot.slane %v314, 4
    %v316 = vmax.f32 %v314, %v315
    %v317 = vrot.slane %v316, 2
    %v318 = vmax.f32 %v316, %v317
    %v319 = vrot.slane %v318, 1
    %v320 = vmax.f32 %v318, %v319
    %v321 = vsel %vm313, %v305, -inf
    %v322 = vrot.slane %v321, 4
    %v323 = vmax.f32 %v321, %v322
    %v324 = vrot.slane %v323, 2
    %v325 = vmax.f32 %v323, %v324
    %v326 = vrot.slane %v325, 1
    %v327 = vmax.f32 %v325, %v326
    %v328 = vsel %vm313, %v306, -inf
    %v329 = vrot.slane %v328, 4
    %v330 = vmax.f32 %v328, %v329
    %v331 = vrot.slane %v330, 2
    %v332 = vmax.f32 %v330, %v331
    %v333 = vrot.slane %v332, 1
    %v334 = vmax.f32 %v332, %v333
    %v335 = vsel %vm313, %v307, -inf
    %v336 = vrot.slane %v335, 4
    %v337 = vmax.f32 %v335, %v336
    %v338 = vrot.slane %v337, 2
    %v339 = vmax.f32 %v337, %v338
    %v340 = vrot.slane %v339, 1
    %v341 = vmax.f32 %v339, %v340
    %v342 = vsel %vm313, %v308, -inf
    %v343 = vrot.slane %v342, 4
    %v344 = vmax.f32 %v342, %v343
    %v345 = vrot.slane %v344, 2
    %v346 = vmax.f32 %v344, %v345
    %v347 = vrot.slane %v346, 1
    %v348 = vmax.f32 %v346, %v347
    %v349 = vsel %vm313, %v309, -inf
    %v350 = vrot.slane %v349, 4
    %v351 = vmax.f32 %v349, %v350
    %v352 = vrot.slane %v351, 2
    %v353 = vmax.f32 %v351, %v352
    %v354 = vrot.slane %v353, 1
    %v355 = vmax.f32 %v353, %v354
    %v356 = vsel %vm313, %v310, -inf
    %v357 = vrot.slane %v356, 4
    %v358 = vmax.f32 %v356, %v357
    %v359 = vrot.slane %v358, 2
    %v360 = vmax.f32 %v358, %v359
    %v361 = vrot.slane %v360, 1
    %v362 = vmax.f32 %v360, %v361
    %v363 = vsel %vm313, %v311, -inf
    %v364 = vrot.slane %v363, 4
    %v365 = vmax.f32 %v363, %v364
    %v366 = vrot.slane %v365, 2
    %v367 = vmax.f32 %v365, %v366
    %v368 = vrot.slane %v367, 1
    %v369 = vmax.f32 %v367, %v368
    %vm378 = vcmask 1041409
    %v379 = vsel %vm378, %v327, %v320
    %vm380 = vcmask 1042434
    %v381 = vsel %vm380, %v334, %v379
    %vm382 = vcmask 1043459
    %v383 = vsel %vm382, %v341, %v381
    %vm384 = vcmask 1044484
    %v385 = vsel %vm384, %v348, %v383
    %vm386 = vcmask 1045509
    %v387 = vsel %vm386, %v355, %v385
    %vm388 = vcmask 1046534
    %v389 = vsel %vm388, %v362, %v387
    %vm390 = vcmask 1047559
    %v391 = vsel %vm390, %v369, %v389
    %v393 = vmax.f32 %v312, %v391
    %vm394 = vcmp.eq.f32.partialorder %v393, -inf
    %v395 = vsub.f32 %v312, %v393
    %v396 = vmul.f32 %v395, 1.442695
    %v397 = vpow.pop %v396
    %v398 = vsel %vm394, 1.0, %v397
    %v399 = vsel %vm394, 1, 0
    %v400 = vcombine.high %v399, %v399
    %v402 = vunpack.c.l.s4 1966171168
    %v403 = vunpack.c.0.s8 %v402
    %v404 = vlaneseq
    %v405 = vshrl.u32 %v404, 7
    %v406 = vsub.s32 %v403, %v405
    %v407 = vrot.slane %v399, %v406
    %v409 = vunpack.c.l.s4 1966171168
    %v410 = vunpack.c.0.s8 %v409
    %v411 = vlaneseq
    %v412 = vshrl.u32 %v411, 7
    %v413 = vsub.s32 %v410, %v412
    %v414 = vrot.slane %v400, %v413
    %v415 = vcombine.high %v407, %v407
    %v416 = vcombine.high %v414, %v414
    %v418 = vunpack.c.l.s4 1966171168
    %v419 = vunpack.c.0.s8 %v418
    %v420 = vlaneseq
    %v421 = vshrl.u32 %v420, 7
    %v422 = vsub.s32 %v419, %v421
    %v423 = vrot.slane %v407, %v422
    %v425 = vunpack.c.l.s4 1966171168
    %v426 = vunpack.c.0.s8 %v425
    %v427 = vlaneseq
    %v428 = vshrl.u32 %v427, 7
    %v429 = vsub.s32 %v426, %v428
    %v430 = vrot.slane %v414, %v429
    %v432 = vunpack.c.l.s4 1966171168
    %v433 = vunpack.c.0.s8 %v432
    %v434 = vlaneseq
    %v435 = vshrl.u32 %v434, 7
    %v436 = vsub.s32 %v433, %v435
    %v437 = vrot.slane %v415, %v436
    %v439 = vunpack.c.l.s4 1966171168
    %v440 = vunpack.c.0.s8 %v439
    %v441 = vlaneseq
    %v442 = vshrl.u32 %v441, 7
    %v443 = vsub.s32 %v440, %v442
    %v444 = vrot.slane %v416, %v443
    %v445 = vcombine.high %v423, %v423
    %v446 = vcombine.high %v430, %v430
    %v447 = vcombine.high %v437, %v437
    %v448 = vcombine.high %v444, %v444
    %vm449 = vcmp.ne.s32.totalorder %v423, 0
    %vm450 = vcmp.ne.s32.totalorder %v437, 0
    %vm451 = vcmp.ne.s32.totalorder %v445, 0
    %vm452 = vcmp.ne.s32.totalorder %v447, 0
    %vm453 = vcmp.ne.s32.totalorder %v430, 0
    %vm454 = vcmp.ne.s32.totalorder %v444, 0
    %vm455 = vcmp.ne.s32.totalorder %v446, 0
    %vm456 = vcmp.ne.s32.totalorder %v448, 0
    %v458 = vcombine.high %v393, %v393
    %v460 = vunpack.c.l.s4 1966171168
    %v461 = vunpack.c.0.s8 %v460
    %v462 = vlaneseq
    %v463 = vshrl.u32 %v462, 7
    %v464 = vsub.s32 %v461, %v463
    %v465 = vrot.slane %v393, %v464
    %v467 = vunpack.c.l.s4 1966171168
    %v468 = vunpack.c.0.s8 %v467
    %v469 = vlaneseq
    %v470 = vshrl.u32 %v469, 7
    %v471 = vsub.s32 %v468, %v470
    %v472 = vrot.slane %v458, %v471
    %v473 = vcombine.high %v465, %v465
    %v474 = vcombine.high %v472, %v472
    %v476 = vunpack.c.l.s4 1966171168
    %v477 = vunpack.c.0.s8 %v476
    %v478 = vlaneseq
    %v479 = vshrl.u32 %v478, 7
    %v480 = vsub.s32 %v477, %v479
    %v481 = vrot.slane %v465, %v480
    %v483 = vunpack.c.l.s4 1966171168
    %v484 = vunpack.c.0.s8 %v483
    %v485 = vlaneseq
    %v486 = vshrl.u32 %v485, 7
    %v487 = vsub.s32 %v484, %v486
    %v488 = vrot.slane %v472, %v487
    %v490 = vunpack.c.l.s4 1966171168
    %v491 = vunpack.c.0.s8 %v490
    %v492 = vlaneseq
    %v493 = vshrl.u32 %v492, 7
    %v494 = vsub.s32 %v491, %v493
    %v495 = vrot.slane %v473, %v494
    %v497 = vunpack.c.l.s4 1966171168
    %v498 = vunpack.c.0.s8 %v497
    %v499 = vlaneseq
    %v500 = vshrl.u32 %v499, 7
    %v501 = vsub.s32 %v498, %v500
    %v502 = vrot.slane %v474, %v501
    %v503 = vcombine.high %v481, %v481
    %v504 = vcombine.high %v488, %v488
    %v505 = vcombine.high %v495, %v495
    %v506 = vcombine.high %v502, %v502
    %v507 = vlaneseq
    %v508 = vshrl.u32 %v507, 7
    %v509 = vsub.s32 0, %v508
    %v510 = vrot.slane %v481, %v509
    %v511 = vlaneseq
    %v512 = vshrl.u32 %v511, 7
    %v513 = vsub.s32 0, %v512
    %v514 = vrot.slane %v495, %v513
    %v515 = vlaneseq
    %v516 = vshrl.u32 %v515, 7
    %v517 = vsub.s32 0, %v516
    %v518 = vrot.slane %v503, %v517
    %v519 = vlaneseq
    %v520 = vshrl.u32 %v519, 7
    %v521 = vsub.s32 0, %v520
    %v522 = vrot.slane %v505, %v521
    %v523 = vlaneseq
    %v524 = vshrl.u32 %v523, 7
    %v525 = vsub.s32 0, %v524
    %v526 = vrot.slane %v488, %v525
    %v527 = vlaneseq
    %v528 = vshrl.u32 %v527, 7
    %v529 = vsub.s32 0, %v528
    %v530 = vrot.slane %v502, %v529
    %v531 = vlaneseq
    %v532 = vshrl.u32 %v531, 7
    %v533 = vsub.s32 0, %v532
    %v534 = vrot.slane %v504, %v533
    %v535 = vlaneseq
    %v536 = vshrl.u32 %v535, 7
    %v537 = vsub.s32 0, %v536
    %v538 = vrot.slane %v506, %v537
    %v547 = vsub.f32 %v304, %v510
    %v548 = vsub.f32 %v305, %v514
    %v549 = vsub.f32 %v306, %v518
    %v550 = vsub.f32 %v307, %v522
    %v551 = vsub.f32 %v308, %v526
    %v552 = vsub.f32 %v309, %v530
    %v553 = vsub.f32 %v310, %v534
    %v554 = vsub.f32 %v311, %v538
    %v555 = vmul.f32 %v547, 1.442695
    %v556 = vpow.pop %v555
    %v557 = vmul.f32 %v548, 1.442695
    %v558 = vpow.pop %v557
    %v559 = vmul.f32 %v549, 1.442695
    %v560 = vpow.pop %v559
    %v561 = vmul.f32 %v550, 1.442695
    %v562 = vpow.pop %v561
    %v563 = vmul.f32 %v551, 1.442695
    %v564 = vpow.pop %v563
    %v565 = vmul.f32 %v552, 1.442695
    %v566 = vpow.pop %v565
    %v567 = vmul.f32 %v553, 1.442695
    %v568 = vpow.pop %v567
    %v569 = vmul.f32 %v554, 1.442695
    %v570 = vpow.pop %v569
    %v571 = vsel %vm449, 1, 0
    %v572 = vsel %vm450, 1, 0
    %v573 = vsel %vm451, 1, 0
    %v574 = vsel %vm452, 1, 0
    %v575 = vsel %vm453, 1, 0
    %v576 = vsel %vm454, 1, 0
    %v577 = vsel %vm455, 1, 0
    %v578 = vsel %vm456, 1, 0
    %v579 = vlaneseq
    %v580 = vshrl.u32 %v579, 7
    %v581 = vsub.s32 0, %v580
    %v582 = vrot.slane %v571, %v581
    %v583 = vlaneseq
    %v584 = vshrl.u32 %v583, 7
    %v585 = vsub.s32 0, %v584
    %v586 = vrot.slane %v572, %v585
    %v587 = vlaneseq
    %v588 = vshrl.u32 %v587, 7
    %v589 = vsub.s32 0, %v588
    %v590 = vrot.slane %v573, %v589
    %v591 = vlaneseq
    %v592 = vshrl.u32 %v591, 7
    %v593 = vsub.s32 0, %v592
    %v594 = vrot.slane %v574, %v593
    %v595 = vlaneseq
    %v596 = vshrl.u32 %v595, 7
    %v597 = vsub.s32 0, %v596
    %v598 = vrot.slane %v575, %v597
    %v599 = vlaneseq
    %v600 = vshrl.u32 %v599, 7
    %v601 = vsub.s32 0, %v600
    %v602 = vrot.slane %v576, %v601
    %v603 = vlaneseq
    %v604 = vshrl.u32 %v603, 7
    %v605 = vsub.s32 0, %v604
    %v606 = vrot.slane %v577, %v605
    %v607 = vlaneseq
    %v608 = vshrl.u32 %v607, 7
    %v609 = vsub.s32 0, %v608
    %v610 = vrot.slane %v578, %v609
    %vm611 = vcmp.eq.s32.totalorder %v582, 1
    %vm612 = vcmp.eq.s32.totalorder %v586, 1
    %vm613 = vcmp.eq.s32.totalorder %v590, 1
    %vm614 = vcmp.eq.s32.totalorder %v594, 1
    %vm615 = vcmp.eq.s32.totalorder %v598, 1
    %vm616 = vcmp.eq.s32.totalorder %v602, 1
    %vm617 = vcmp.eq.s32.totalorder %v606, 1
    %vm618 = vcmp.eq.s32.totalorder %v610, 1
    %v619 = vsel %vm611, 0.0, %v556
    %v620 = vsel %vm612, 0.0, %v558
    %v621 = vsel %vm613, 0.0, %v560
    %v622 = vsel %vm614, 0.0, %v562
    %v623 = vsel %vm615, 0.0, %v564
    %v624 = vsel %vm616, 0.0, %v566
    %v625 = vsel %vm617, 0.0, %v568
    %v626 = vsel %vm618, 0.0, %v570
    %v627 = vld [vmem:[#allocation4] sm:$0xff]
    %v628 = vmul.f32 %v398, %v627
    %v629 = vsel %vm313, %v619, 0.0
    %v630 = vrot.slane %v629, 4
    %v631 = vadd.f32 %v629, %v630
    %v632 = vrot.slane %v631, 2
    %v633 = vadd.f32 %v631, %v632
    %v634 = vrot.slane %v633, 1
    %v635 = vadd.f32 %v633, %v634
    %v636 = vsel %vm313, %v620, 0.0
    %v637 = vrot.slane %v636, 4
    %v638 = vadd.f32 %v636, %v637
    %v639 = vrot.slane %v638, 2
    %v640 = vadd.f32 %v638, %v639
    %v641 = vrot.slane %v640, 1
    %v642 = vadd.f32 %v640, %v641
    %v643 = vsel %vm313, %v621, 0.0
    %v644 = vrot.slane %v643, 4
    %v645 = vadd.f32 %v643, %v644
    %v646 = vrot.slane %v645, 2
    %v647 = vadd.f32 %v645, %v646
    %v648 = vrot.slane %v647, 1
    %v649 = vadd.f32 %v647, %v648
    %v650 = vsel %vm313, %v622, 0.0
    %v651 = vrot.slane %v650, 4
    %v652 = vadd.f32 %v650, %v651
    %v653 = vrot.slane %v652, 2
    %v654 = vadd.f32 %v652, %v653
    %v655 = vrot.slane %v654, 1
    %v656 = vadd.f32 %v654, %v655
    %v657 = vsel %vm313, %v623, 0.0
    %v658 = vrot.slane %v657, 4
    %v659 = vadd.f32 %v657, %v658
    %v660 = vrot.slane %v659, 2
    %v661 = vadd.f32 %v659, %v660
    %v662 = vrot.slane %v661, 1
    %v663 = vadd.f32 %v661, %v662
    %v664 = vsel %vm313, %v624, 0.0
    %v665 = vrot.slane %v664, 4
    %v666 = vadd.f32 %v664, %v665
    %v667 = vrot.slane %v666, 2
    %v668 = vadd.f32 %v666, %v667
    %v669 = vrot.slane %v668, 1
    %v670 = vadd.f32 %v668, %v669
    %v671 = vsel %vm313, %v625, 0.0
    %v672 = vrot.slane %v671, 4
    %v673 = vadd.f32 %v671, %v672
    %v674 = vrot.slane %v673, 2
    %v675 = vadd.f32 %v673, %v674
    %v676 = vrot.slane %v675, 1
    %v677 = vadd.f32 %v675, %v676
    %v678 = vsel %vm313, %v626, 0.0
    %v679 = vrot.slane %v678, 4
    %v680 = vadd.f32 %v678, %v679
    %v681 = vrot.slane %v680, 2
    %v682 = vadd.f32 %v680, %v681
    %v683 = vrot.slane %v682, 1
    %v684 = vadd.f32 %v682, %v683
    %v693 = vsel %vm378, %v642, %v635
    %v694 = vsel %vm380, %v649, %v693
    %v695 = vsel %vm382, %v656, %v694
    %v696 = vsel %vm384, %v663, %v695
    %v697 = vsel %vm386, %v670, %v696
    %v698 = vsel %vm388, %v677, %v697
    %v699 = vsel %vm390, %v684, %v698
    %v701 = vadd.f32 %v628, %v699
    %702 = vst.msk [vmem:[#allocation4] sm:$0xff] %vm313, %v701
    %v703 = vld [vmem:[#allocation5] sm:$0xff]
    %705 = vset.pattern.permute.xlu0 0
    %706 = vperm.xlu0 %705, %v398
    %v707 = vpop.permute.xlu0 %706
    %v709 = vmul.f32 %v707, %v703
    %711 = vset.pattern.permute.xlu0 0
    %712 = vperm.xlu0 %711, %v619
    %v713 = vpop.permute.xlu0 %712
    %716 = vset.pattern.permute.xlu0 0
    %717 = vperm.xlu0 %716, %v620
    %v718 = vpop.permute.xlu0 %717
    %721 = vset.pattern.permute.xlu0 0
    %722 = vperm.xlu0 %721, %v621
    %v723 = vpop.permute.xlu0 %722
    %726 = vset.pattern.permute.xlu0 0
    %727 = vperm.xlu0 %726, %v622
    %v728 = vpop.permute.xlu0 %727
    %731 = vset.pattern.permute.xlu0 0
    %732 = vperm.xlu0 %731, %v623
    %v733 = vpop.permute.xlu0 %732
    %736 = vset.pattern.permute.xlu0 0
    %737 = vperm.xlu0 %736, %v624
    %v738 = vpop.permute.xlu0 %737
    %741 = vset.pattern.permute.xlu0 0
    %742 = vperm.xlu0 %741, %v625
    %v743 = vpop.permute.xlu0 %742
    %746 = vset.pattern.permute.xlu0 0
    %747 = vperm.xlu0 %746, %v626
    %v748 = vpop.permute.xlu0 %747
    %v750 = vmul.f32 %v713, %v156
    %v751 = vmul.f32 %v718, %v157
    %v752 = vmul.f32 %v723, %v158
    %v753 = vmul.f32 %v728, %v159
    %v754 = vmul.f32 %v733, %v160
    %v755 = vmul.f32 %v738, %v161
    %v756 = vmul.f32 %v743, %v162
    %v757 = vmul.f32 %v748, %v163
    %v758 = vsel %vm271, %v750, 0.0
    %v759 = vrot.slane %v758, 4
    %v760 = vadd.f32 %v758, %v759
    %v761 = vrot.slane %v760, 2
    %v762 = vadd.f32 %v760, %v761
    %v763 = vrot.slane %v762, 1
    %v764 = vadd.f32 %v762, %v763
    %v765 = vsel %vm271, %v751, 0.0
    %v766 = vrot.slane %v765, 4
    %v767 = vadd.f32 %v765, %v766
    %v768 = vrot.slane %v767, 2
    %v769 = vadd.f32 %v767, %v768
    %v770 = vrot.slane %v769, 1
    %v771 = vadd.f32 %v769, %v770
    %v772 = vsel %vm271, %v752, 0.0
    %v773 = vrot.slane %v772, 4
    %v774 = vadd.f32 %v772, %v773
    %v775 = vrot.slane %v774, 2
    %v776 = vadd.f32 %v774, %v775
    %v777 = vrot.slane %v776, 1
    %v778 = vadd.f32 %v776, %v777
    %v779 = vsel %vm271, %v753, 0.0
    %v780 = vrot.slane %v779, 4
    %v781 = vadd.f32 %v779, %v780
    %v782 = vrot.slane %v781, 2
    %v783 = vadd.f32 %v781, %v782
    %v784 = vrot.slane %v783, 1
    %v785 = vadd.f32 %v783, %v784
    %v786 = vsel %vm271, %v754, 0.0
    %v787 = vrot.slane %v786, 4
    %v788 = vadd.f32 %v786, %v787
    %v789 = vrot.slane %v788, 2
    %v790 = vadd.f32 %v788, %v789
    %v791 = vrot.slane %v790, 1
    %v792 = vadd.f32 %v790, %v791
    %v793 = vsel %vm271, %v755, 0.0
    %v794 = vrot.slane %v793, 4
    %v795 = vadd.f32 %v793, %v794
    %v796 = vrot.slane %v795, 2
    %v797 = vadd.f32 %v795, %v796
    %v798 = vrot.slane %v797, 1
    %v799 = vadd.f32 %v797, %v798
    %v800 = vsel %vm271, %v756, 0.0
    %v801 = vrot.slane %v800, 4
    %v802 = vadd.f32 %v800, %v801
    %v803 = vrot.slane %v802, 2
    %v804 = vadd.f32 %v802, %v803
    %v805 = vrot.slane %v804, 1
    %v806 = vadd.f32 %v804, %v805
    %v807 = vsel %vm271, %v757, 0.0
    %v808 = vrot.slane %v807, 4
    %v809 = vadd.f32 %v807, %v808
    %v810 = vrot.slane %v809, 2
    %v811 = vadd.f32 %v809, %v810
    %v812 = vrot.slane %v811, 1
    %v813 = vadd.f32 %v811, %v812
    %v822 = vsel %vm378, %v771, %v764
    %v823 = vsel %vm380, %v778, %v822
    %v824 = vsel %vm382, %v785, %v823
    %v825 = vsel %vm384, %v792, %v824
    %v826 = vsel %vm386, %v799, %v825
    %v827 = vsel %vm388, %v806, %v826
    %v828 = vsel %vm390, %v813, %v827
    %v830 = vadd.f32 %v709, %v828
    %831 = vst.msk [vmem:[#allocation5] sm:$0xff] %vm271, %v830
    %832 = vst.msk [vmem:[#allocation3] sm:$0xff] %vm313, %v393
    %s833 = smul.u32 0, 8
    %s834 = scalar_lea.vmem [#allocation6], %s833
    %835 = vst.msk [vmem:[%s834] sm:$0xff] %vm313, %v304
    %836 = vst.msk [vmem:[%s834 + $0x8] sm:$0xff] %vm313, %v305
    %837 = vst.msk [vmem:[%s834 + $0x10] sm:$0xff] %vm313, %v306
    %838 = vst.msk [vmem:[%s834 + $0x18] sm:$0xff] %vm313, %v307
    %839 = vst.msk [vmem:[%s834 + $0x20] sm:$0xff] %vm313, %v308
    %840 = vst.msk [vmem:[%s834 + $0x28] sm:$0xff] %vm313, %v309
    %841 = vst.msk [vmem:[%s834 + $0x30] sm:$0xff] %vm313, %v310
    %842 = vst.msk [vmem:[%s834 + $0x38] sm:$0xff] %vm313, %v311
    // Predicated region
    $region42: #{tpu_custom_call.1} parent=1 // pred_check
      %p843 = pneg %p68
    $region43: #{tpu_custom_call.1} parent=1 // pred_check_branch
      %845 = sbr.rel (%p843) target = $region45
    $region44: #{tpu_custom_call.1} parent=1 // pred_region
      %v846 = vld [vmem:[#allocation4] sm:$0xff]
      %v847 = vrcp.pop %v846
      %v848 = vld [vmem:[#allocation3] sm:$0xff]
      %v849 = vld [vmem:[#allocation6] sm:$0xff]
      %v850 = vld [vmem:[#allocation6 + $0x8] sm:$0xff]
      %v851 = vld [vmem:[#allocation6 + $0x10] sm:$0xff]
      %v852 = vld [vmem:[#allocation6 + $0x18] sm:$0xff]
      %v853 = vld [vmem:[#allocation6 + $0x20] sm:$0xff]
      %v854 = vld [vmem:[#allocation6 + $0x28] sm:$0xff]
      %v855 = vld [vmem:[#allocation6 + $0x30] sm:$0xff]
      %v856 = vld [vmem:[#allocation6 + $0x38] sm:$0xff]
      %v858 = vcombine.high %v848, %v848
      %v860 = vunpack.c.l.s4 1966171168
      %v861 = vunpack.c.0.s8 %v860
      %v862 = vlaneseq
      %v863 = vshrl.u32 %v862, 7
      %v864 = vsub.s32 %v861, %v863
      %v865 = vrot.slane %v848, %v864
      %v867 = vunpack.c.l.s4 1966171168
      %v868 = vunpack.c.0.s8 %v867
      %v869 = vlaneseq
      %v870 = vshrl.u32 %v869, 7
      %v871 = vsub.s32 %v868, %v870
      %v872 = vrot.slane %v858, %v871
      %v873 = vcombine.high %v865, %v865
      %v874 = vcombine.high %v872, %v872
      %v876 = vunpack.c.l.s4 1966171168
      %v877 = vunpack.c.0.s8 %v876
      %v878 = vlaneseq
      %v879 = vshrl.u32 %v878, 7
      %v880 = vsub.s32 %v877, %v879
      %v881 = vrot.slane %v865, %v880
      %v883 = vunpack.c.l.s4 1966171168
      %v884 = vunpack.c.0.s8 %v883
      %v885 = vlaneseq
      %v886 = vshrl.u32 %v885, 7
      %v887 = vsub.s32 %v884, %v886
      %v888 = vrot.slane %v872, %v887
      %v890 = vunpack.c.l.s4 1966171168
      %v891 = vunpack.c.0.s8 %v890
      %v892 = vlaneseq
      %v893 = vshrl.u32 %v892, 7
      %v894 = vsub.s32 %v891, %v893
      %v895 = vrot.slane %v873, %v894
      %v897 = vunpack.c.l.s4 1966171168
      %v898 = vunpack.c.0.s8 %v897
      %v899 = vlaneseq
      %v900 = vshrl.u32 %v899, 7
      %v901 = vsub.s32 %v898, %v900
      %v902 = vrot.slane %v874, %v901
      %v903 = vcombine.high %v881, %v881
      %v904 = vcombine.high %v888, %v888
      %v905 = vcombine.high %v895, %v895
      %v906 = vcombine.high %v902, %v902
      %v907 = vlaneseq
      %v908 = vshrl.u32 %v907, 7
      %v909 = vsub.s32 0, %v908
      %v910 = vrot.slane %v881, %v909
      %v911 = vlaneseq
      %v912 = vshrl.u32 %v911, 7
      %v913 = vsub.s32 0, %v912
      %v914 = vrot.slane %v895, %v913
      %v915 = vlaneseq
      %v916 = vshrl.u32 %v915, 7
      %v917 = vsub.s32 0, %v916
      %v918 = vrot.slane %v903, %v917
      %v919 = vlaneseq
      %v920 = vshrl.u32 %v919, 7
      %v921 = vsub.s32 0, %v920
      %v922 = vrot.slane %v905, %v921
      %v923 = vlaneseq
      %v924 = vshrl.u32 %v923, 7
      %v925 = vsub.s32 0, %v924
      %v926 = vrot.slane %v888, %v925
      %v927 = vlaneseq
      %v928 = vshrl.u32 %v927, 7
      %v929 = vsub.s32 0, %v928
      %v930 = vrot.slane %v902, %v929
      %v931 = vlaneseq
      %v932 = vshrl.u32 %v931, 7
      %v933 = vsub.s32 0, %v932
      %v934 = vrot.slane %v904, %v933
      %v935 = vlaneseq
      %v936 = vshrl.u32 %v935, 7
      %v937 = vsub.s32 0, %v936
      %v938 = vrot.slane %v906, %v937
      %v947 = vsub.f32 %v849, %v910
      %v948 = vsub.f32 %v850, %v914
      %v949 = vsub.f32 %v851, %v918
      %v950 = vsub.f32 %v852, %v922
      %v951 = vsub.f32 %v853, %v926
      %v952 = vsub.f32 %v854, %v930
      %v953 = vsub.f32 %v855, %v934
      %v954 = vsub.f32 %v856, %v938
      %v955 = vmul.f32 %v947, 1.442695
      %v956 = vpow.pop %v955
      %v957 = vmul.f32 %v948, 1.442695
      %v958 = vpow.pop %v957
      %v959 = vmul.f32 %v949, 1.442695
      %v960 = vpow.pop %v959
      %v961 = vmul.f32 %v950, 1.442695
      %v962 = vpow.pop %v961
      %v963 = vmul.f32 %v951, 1.442695
      %v964 = vpow.pop %v963
      %v965 = vmul.f32 %v952, 1.442695
      %v966 = vpow.pop %v965
      %v967 = vmul.f32 %v953, 1.442695
      %v968 = vpow.pop %v967
      %v969 = vmul.f32 %v954, 1.442695
      %v970 = vpow.pop %v969
      %v972 = vcombine.high %v847, %v847
      %v974 = vunpack.c.l.s4 1966171168
      %v975 = vunpack.c.0.s8 %v974
      %v976 = vlaneseq
      %v977 = vshrl.u32 %v976, 7
      %v978 = vsub.s32 %v975, %v977
      %v979 = vrot.slane %v847, %v978
      %v981 = vunpack.c.l.s4 1966171168
      %v982 = vunpack.c.0.s8 %v981
      %v983 = vlaneseq
      %v984 = vshrl.u32 %v983, 7
      %v985 = vsub.s32 %v982, %v984
      %v986 = vrot.slane %v972, %v985
      %v987 = vcombine.high %v979, %v979
      %v988 = vcombine.high %v986, %v986
      %v990 = vunpack.c.l.s4 1966171168
      %v991 = vunpack.c.0.s8 %v990
      %v992 = vlaneseq
      %v993 = vshrl.u32 %v992, 7
      %v994 = vsub.s32 %v991, %v993
      %v995 = vrot.slane %v979, %v994
      %v997 = vunpack.c.l.s4 1966171168
      %v998 = vunpack.c.0.s8 %v997
      %v999 = vlaneseq
      %v1000 = vshrl.u32 %v999, 7
      %v1001 = vsub.s32 %v998, %v1000
      %v1002 = vrot.slane %v986, %v1001
      %v1004 = vunpack.c.l.s4 1966171168
      %v1005 = vunpack.c.0.s8 %v1004
      %v1006 = vlaneseq
      %v1007 = vshrl.u32 %v1006, 7
      %v1008 = vsub.s32 %v1005, %v1007
      %v1009 = vrot.slane %v987, %v1008
      %v1011 = vunpack.c.l.s4 1966171168
      %v1012 = vunpack.c.0.s8 %v1011
      %v1013 = vlaneseq
      %v1014 = vshrl.u32 %v1013, 7
      %v1015 = vsub.s32 %v1012, %v1014
      %v1016 = vrot.slane %v988, %v1015
      %v1017 = vcombine.high %v995, %v995
      %v1018 = vcombine.high %v1002, %v1002
      %v1019 = vcombine.high %v1009, %v1009
      %v1020 = vcombine.high %v1016, %v1016
      %v1021 = vlaneseq
      %v1022 = vshrl.u32 %v1021, 7
      %v1023 = vsub.s32 0, %v1022
      %v1024 = vrot.slane %v995, %v1023
      %v1025 = vlaneseq
      %v1026 = vshrl.u32 %v1025, 7
      %v1027 = vsub.s32 0, %v1026
      %v1028 = vrot.slane %v1009, %v1027
      %v1029 = vlaneseq
      %v1030 = vshrl.u32 %v1029, 7
      %v1031 = vsub.s32 0, %v1030
      %v1032 = vrot.slane %v1017, %v1031
      %v1033 = vlaneseq
      %v1034 = vshrl.u32 %v1033, 7
      %v1035 = vsub.s32 0, %v1034
      %v1036 = vrot.slane %v1019, %v1035
      %v1037 = vlaneseq
      %v1038 = vshrl.u32 %v1037, 7
      %v1039 = vsub.s32 0, %v1038
      %v1040 = vrot.slane %v1002, %v1039
      %v1041 = vlaneseq
      %v1042 = vshrl.u32 %v1041, 7
      %v1043 = vsub.s32 0, %v1042
      %v1044 = vrot.slane %v1016, %v1043
      %v1045 = vlaneseq
      %v1046 = vshrl.u32 %v1045, 7
      %v1047 = vsub.s32 0, %v1046
      %v1048 = vrot.slane %v1018, %v1047
      %v1049 = vlaneseq
      %v1050 = vshrl.u32 %v1049, 7
      %v1051 = vsub.s32 0, %v1050
      %v1052 = vrot.slane %v1020, %v1051
      %v1061 = vmul.f32 %v956, %v1024
      %v1062 = vmul.f32 %v958, %v1028
      %v1063 = vmul.f32 %v960, %v1032
      %v1064 = vmul.f32 %v962, %v1036
      %v1065 = vmul.f32 %v964, %v1040
      %v1066 = vmul.f32 %v966, %v1044
      %v1067 = vmul.f32 %v968, %v1048
      %v1068 = vmul.f32 %v970, %v1052
      %1077 = vset.pattern.permute.xlu0 0
      %1078 = vperm.xlu0 %1077, %v1061
      %v1079 = vpop.permute.xlu0 %1078
      %1080 = vset.pattern.permute.xlu0 0
      %1081 = vperm.xlu0 %1080, %v1062
      %v1082 = vpop.permute.xlu0 %1081
      %1083 = vset.pattern.permute.xlu0 0
      %1084 = vperm.xlu0 %1083, %v1063
      %v1085 = vpop.permute.xlu0 %1084
      %1086 = vset.pattern.permute.xlu0 0
      %1087 = vperm.xlu0 %1086, %v1064
      %v1088 = vpop.permute.xlu0 %1087
      %1089 = vset.pattern.permute.xlu0 0
      %1090 = vperm.xlu0 %1089, %v1065
      %v1091 = vpop.permute.xlu0 %1090
      %1092 = vset.pattern.permute.xlu0 0
      %1093 = vperm.xlu0 %1092, %v1066
      %v1094 = vpop.permute.xlu0 %1093
      %1095 = vset.pattern.permute.xlu0 0
      %1096 = vperm.xlu0 %1095, %v1067
      %v1097 = vpop.permute.xlu0 %1096
      %1098 = vset.pattern.permute.xlu0 0
      %1099 = vperm.xlu0 %1098, %v1068
      %v1100 = vpop.permute.xlu0 %1099
      %v1101 = vlaneseq
      %v1102 = vand.u32 %v1101, 127
      %v1103 = vlaneseq
      %v1104 = vshrl.u32 %v1103, 7
      %v1105 = vsub.s32 %v1102, %v1104
      %v1106 = vrot.slane %v1079, %v1105
      %v1107 = vlaneseq
      %v1108 = vshrl.u32 %v1107, 7
      %v1109 = vsub.s32 %v1102, %v1108
      %v1110 = vrot.slane %v1082, %v1109
      %v1111 = vlaneseq
      %v1112 = vshrl.u32 %v1111, 7
      %v1113 = vsub.s32 %v1102, %v1112
      %v1114 = vrot.slane %v1085, %v1113
      %v1115 = vlaneseq
      %v1116 = vshrl.u32 %v1115, 7
      %v1117 = vsub.s32 %v1102, %v1116
      %v1118 = vrot.slane %v1088, %v1117
      %v1119 = vlaneseq
      %v1120 = vshrl.u32 %v1119, 7
      %v1121 = vsub.s32 %v1102, %v1120
      %v1122 = vrot.slane %v1091, %v1121
      %v1123 = vlaneseq
      %v1124 = vshrl.u32 %v1123, 7
      %v1125 = vsub.s32 %v1102, %v1124
      %v1126 = vrot.slane %v1094, %v1125
      %v1127 = vlaneseq
      %v1128 = vshrl.u32 %v1127, 7
      %v1129 = vsub.s32 %v1102, %v1128
      %v1130 = vrot.slane %v1097, %v1129
      %v1131 = vlaneseq
      %v1132 = vshrl.u32 %v1131, 7
      %v1133 = vsub.s32 %v1102, %v1132
      %v1134 = vrot.slane %v1100, %v1133
      %v1135 = vsel %vm378, %v1110, %v1106
      %v1136 = vsel %vm380, %v1114, %v1135
      %v1137 = vsel %vm382, %v1118, %v1136
      %v1138 = vsel %vm384, %v1122, %v1137
      %v1139 = vsel %vm386, %v1126, %v1138
      %v1140 = vsel %vm388, %v1130, %v1139
      %v1141 = vsel %vm390, %v1134, %v1140
      %vm1143 = vcmask 64512
      %1144 = vst.msk [vmem:[#allocation14] sm:$0xff] %vm1143, %v1141
      %v1145 = vld [vmem:[#allocation5] sm:$0xff]
      %1146 = vset.pattern.permute.xlu0 0
      %1147 = vperm.xlu0 %1146, %v847
      %v1148 = vpop.permute.xlu0 %1147
      %v1150 = vmul.f32 %v1145, %v1148
      %v1151 = vld [vmem:[%s0] sm:$0xff]
      %v1152 = vld [vmem:[#allocation10] sm:$0xff]
      %v1153 = vld [vmem:[#allocation10 + $0x8] sm:$0xff]
      %v1154 = vld [vmem:[#allocation10 + $0x10] sm:$0xff]
      %v1155 = vld [vmem:[#allocation10 + $0x18] sm:$0xff]
      %v1156 = vld [vmem:[#allocation12] sm:$0xff]
      %v1157 = vld [vmem:[#allocation12 + $0x8] sm:$0xff]
      %v1158 = vld [vmem:[#allocation12 + $0x10] sm:$0xff]
      %v1159 = vld [vmem:[#allocation12 + $0x18] sm:$0xff]
      %v1161 = vsel %vm271, %v1150, 0
      %1163 = vmatprep.subr.mxu0 0.0
      %1164 = vmatpush1.msra.mxu0 %v1156
      %1165 = vmatprep.subr.mxu0 0.0
      %1166 = vmatpush1.msra.mxu0 %v1157
      %1167 = vmatprep.subr.mxu0 0.0
      %1168 = vmatpush1.msra.mxu0 %v1158
      %1169 = vmatprep.subr.mxu0 0.0
      %1170 = vmatpush1.msra.mxu0 %v1159
      %1171 = vmatprep.subr.mxu0 0.0
      %1172 = vmatpush1.msra.mxu0 0.0
      %1173 = vmatprep.subr.mxu0 0.0
      %1174 = vmatpush1.msra.mxu0 0.0
      %1175 = vmatprep.subr.mxu0 0.0
      %1176 = vmatpush1.msra.mxu0 0.0
      %1177 = vmatprep.subr.mxu0 0.0
      %1178 = vmatpush1.msra.mxu0 0.0
      %1179 = vmatprep.subr.mxu0 0.0
      %1180 = vmatpush1.msra.mxu0 0.0
      %1181 = vmatprep.subr.mxu0 0.0
      %1182 = vmatpush1.msra.mxu0 0.0
      %1183 = vmatprep.subr.mxu0 0.0
      %1184 = vmatpush1.msra.mxu0 0.0
      %1185 = vmatprep.subr.mxu0 0.0
      %1186 = vmatpush1.msra.mxu0 0.0
      %1187 = vmatprep.subr.mxu0 0.0
      %1188 = vmatpush1.msra.mxu0 0.0
      %1189 = vmatprep.subr.mxu0 0.0
      %1190 = vmatpush1.msra.mxu0 0.0
      %1191 = vmatprep.subr.mxu0 0.0
      %1192 = vmatpush1.msra.mxu0 0.0
      %1193 = vmatprep.subr.mxu0 0.0
      %1194 = vmatpush1.msra.mxu0 0.0
      %1195 = vmatprep.subr.mxu0 0.0
      %1196 = vmatpush1.msra.mxu0 0.0
      %1197 = vmatprep.subr.mxu0 0.0
      %1198 = vmatpush1.msra.mxu0 0.0
      %1199 = vmatprep.subr.mxu0 0.0
      %1200 = vmatpush1.msra.mxu0 0.0
      %1201 = vmatprep.subr.mxu0 0.0
      %1202 = vmatpush1.msra.mxu0 0.0
      %1203 = vmatprep.subr.mxu0 0.0
      %1204 = vmatpush1.msra.mxu0 0.0
      %1205 = vmatprep.subr.mxu0 0.0
      %1206 = vmatpush1.msra.mxu0 0.0
      %1207 = vmatprep.subr.mxu0 0.0
      %1208 = vmatpush1.msra.mxu0 0.0
      %1209 = vmatprep.subr.mxu0 0.0
      %1210 = vmatpush1.msra.mxu0 0.0
      %1211 = vmatprep.subr.mxu0 0.0
      %1212 = vmatpush1.msra.mxu0 0.0
      %1213 = vmatprep.subr.mxu0 0.0
      %1214 = vmatpush1.msra.mxu0 0.0
      %1215 = vmatprep.subr.mxu0 0.0
      %1216 = vmatpush1.msra.mxu0 0.0
      %1217 = vmatprep.subr.mxu0 0.0
      %1218 = vmatpush1.msra.mxu0 0.0
      %1219 = vmatprep.subr.mxu0 0.0
      %1220 = vmatpush1.msra.mxu0 0.0
      %1221 = vmatprep.subr.mxu0 0.0
      %1222 = vmatpush1.msra.mxu0 0.0
      %1223 = vmatprep.subr.mxu0 0.0
      %1224 = vmatpush1.msra.mxu0 0.0
      %1225 = vmatprep.subr.mxu0 0.0
      %1226 = vmatpush1.msra.mxu0 0.0
      %1227 = vmatprep.mubr.f32.mxu0 0.0
      %1228 = vmatmul.mubr.f32.gmra.mrb[0].mxu0 %v1161
      %v1229 = vpop.f32.mrb[0].mxu0
      %v1230 = vadd.f32 0.0, %v1229
      %v1231 = vpop.f32.mrb[0].mxu0
      %1232 = vdwg.mxu0
      %v1234 = vsel %vm271, %v1151, 0
      %1236 = vmatprep.subr.mxu0 0.0
      %1237 = vmatpush1.msra.mxu0 %v1152
      %1238 = vmatprep.subr.mxu0 0.0
      %1239 = vmatpush1.msra.mxu0 %v1153
      %1240 = vmatprep.subr.mxu0 0.0
      %1241 = vmatpush1.msra.mxu0 %v1154
      %1242 = vmatprep.subr.mxu0 0.0
      %1243 = vmatpush1.msra.mxu0 %v1155
      %1244 = vmatprep.subr.mxu0 0.0
      %1245 = vmatpush1.msra.mxu0 0.0
      %1246 = vmatprep.subr.mxu0 0.0
      %1247 = vmatpush1.msra.mxu0 0.0
      %1248 = vmatprep.subr.mxu0 0.0
      %1249 = vmatpush1.msra.mxu0 0.0
      %1250 = vmatprep.subr.mxu0 0.0
      %1251 = vmatpush1.msra.mxu0 0.0
      %1252 = vmatprep.subr.mxu0 0.0
      %1253 = vmatpush1.msra.mxu0 0.0
      %1254 = vmatprep.subr.mxu0 0.0
      %1255 = vmatpush1.msra.mxu0 0.0
      %1256 = vmatprep.subr.mxu0 0.0
      %1257 = vmatpush1.msra.mxu0 0.0
      %1258 = vmatprep.subr.mxu0 0.0
      %1259 = vmatpush1.msra.mxu0 0.0
      %1260 = vmatprep.subr.mxu0 0.0
      %1261 = vmatpush1.msra.mxu0 0.0
      %1262 = vmatprep.subr.mxu0 0.0
      %1263 = vmatpush1.msra.mxu0 0.0
      %1264 = vmatprep.subr.mxu0 0.0
      %1265 = vmatpush1.msra.mxu0 0.0
      %1266 = vmatprep.subr.mxu0 0.0
      %1267 = vmatpush1.msra.mxu0 0.0
      %1268 = vmatprep.subr.mxu0 0.0
      %1269 = vmatpush1.msra.mxu0 0.0
      %1270 = vmatprep.subr.mxu0 0.0
      %1271 = vmatpush1.msra.mxu0 0.0
      %1272 = vmatprep.subr.mxu0 0.0
      %1273 = vmatpush1.msra.mxu0 0.0
      %1274 = vmatprep.subr.mxu0 0.0
      %1275 = vmatpush1.msra.mxu0 0.0
      %1276 = vmatprep.subr.mxu0 0.0
      %1277 = vmatpush1.msra.mxu0 0.0
      %1278 = vmatprep.subr.mxu0 0.0
      %1279 = vmatpush1.msra.mxu0 0.0
      %1280 = vmatprep.subr.mxu0 0.0
      %1281 = vmatpush1.msra.mxu0 0.0
      %1282 = vmatprep.subr.mxu0 0.0
      %1283 = vmatpush1.msra.mxu0 0.0
      %1284 = vmatprep.subr.mxu0 0.0
      %1285 = vmatpush1.msra.mxu0 0.0
      %1286 = vmatprep.subr.mxu0 0.0
      %1287 = vmatpush1.msra.mxu0 0.0
      %1288 = vmatprep.subr.mxu0 0.0
      %1289 = vmatpush1.msra.mxu0 0.0
      %1290 = vmatprep.subr.mxu0 0.0
      %1291 = vmatpush1.msra.mxu0 0.0
      %1292 = vmatprep.subr.mxu0 0.0
      %1293 = vmatpush1.msra.mxu0 0.0
      %1294 = vmatprep.subr.mxu0 0.0
      %1295 = vmatpush1.msra.mxu0 0.0
      %1296 = vmatprep.subr.mxu0 0.0
      %1297 = vmatpush1.msra.mxu0 0.0
      %1298 = vmatprep.subr.mxu0 0.0
      %1299 = vmatpush1.msra.mxu0 0.0
      %1300 = vmatprep.mubr.f32.mxu0 0.0
      %1301 = vmatmul.mubr.f32.gmra.mrb[0].mxu0 %v1234
      %v1302 = vpop.f32.mrb[0].mxu0
      %v1303 = vadd.f32 %v1230, %v1302
      %v1304 = vpop.f32.mrb[0].mxu0
      %1305 = vdwg.mxu0
      %v1306 = vtanh.pop %v1303
      %1307 = vst.msk [vmem:[#allocation13] sm:$0xff] %vm271, %v1306
    $region45: #{tpu_custom_call.1} parent=1 // pred_fallthru
      _
    // Predicated region
    $region46: #{tpu_custom_call.1} parent=1 // pred_check
      _
    $region47: #{tpu_custom_call.1} parent=1 // pred_check_branch
      %1309 = sbr.rel (0) target = $region49
    $region48: #{tpu_custom_call.1} parent=1 // pred_region
      %s1311 = ssub.s32 128, 128
      %1312 = vsyncadd [#allocation9], %s1311
      %s1314 = sshll.u32 [#allocation13], 4
      %s1315 = int_to_ptr.vmem [resolvable:$true] %s1314
      %1317 = dma.vmem_to_hbm [thread:$0]  %s1315, 128, %s6, [#allocation9]
    $region49: #{tpu_custom_call.1} parent=1 // pred_fallthru
      _
    // Predicated region
    $region50: #{tpu_custom_call.1} parent=1 // pred_check
      _
    $region51: #{tpu_custom_call.1} parent=1 // pred_check_branch
      %1319 = sbr.rel (0) target = $region53
    $region52: #{tpu_custom_call.1} parent=1 // pred_region
      %s1321 = ssub.s32 128, 128
      %1322 = vsyncadd [#allocation15], %s1321
      %s1324 = sshll.u32 [#allocation14], 4
      %s1325 = int_to_ptr.vmem [resolvable:$true] %s1324
      %1327 = dma.vmem_to_hbm [thread:$0]  %s1325, 128, %s7, [#allocation15]
    $region53: #{tpu_custom_call.1} parent=1 // pred_fallthru
      _
    // Predicated region
    $region54: #{tpu_custom_call.1} parent=1 // pred_check
      _
    $region55: #{tpu_custom_call.1} parent=1 // pred_check_branch
      %1329 = sbr.rel (0) target = $region57
    $region56: #{tpu_custom_call.1} parent=1 // pred_region
      %1330 = dma.done [#allocation9], 128
    $region57: #{tpu_custom_call.1} parent=1 // pred_fallthru
      _
    // Predicated region
    $region58: #{tpu_custom_call.1} parent=1 // pred_check
      _
    $region59: #{tpu_custom_call.1} parent=1 // pred_check_branch
      %1332 = sbr.rel (0) target = $region61
    $region60: #{tpu_custom_call.1} parent=1 // pred_region
      %1333 = dma.done [#allocation15], 128
    $region61: #{tpu_custom_call.1} parent=1 // pred_fallthru
      _
    %1334 = vsyncpa [#allocation8], 1
    %1335 = vsyncpa [#allocation11], 1
    %1336 = vsyncpa [#allocation9], 1
    %1337 = vsyncpa [#allocation15], 1

</llo_original>
